<compile_context>
chip_gen: v6e
topology: v6e:2x2x1
jax: 0.10.0
libtpu: 0.0.40
codegen_flags: <defaults>
</compile_context>

<pallas_src>
import functools
import math

import jax
import jax.numpy as jnp
from jax import lax
from jax.experimental import pallas as pl
from jax.experimental.pallas import tpu as pltpu

LANE = 128  # every channel-like dim is zero-padded to one full lane group


# ----------------------------------------------------------------------------
# Fused Pallas kernel: one batch image per grid step, everything stays in VMEM.
# ----------------------------------------------------------------------------
def _fused_forward_kernel(h, w, x_ref, wstem_ref, w1x1_ref, wfc_ref, aff_ref,
                          out_ref):
    """
    x_ref    : ((h+2)*w, Cpad)  bf16  image with kx-shifts folded into channels
    wstem_ref: (3, Cpad, 128)   bf16  stem conv weight, ky x (kx,cin) x C0p
    w1x1_ref : (128, 128)       bf16  lastact 1x1 conv weight (C0p x Fp)
    wfc_ref  : (128, 128)       f32   classifier weight (Fp x NCp)
    aff_ref  : (8, 128)         f32   rows: 0=s01 1=b01 2=s2 3=b2 4=b_fc
    out_ref  : (1, 128)         f32   lane-padded logits for this image
    """
    hw = h * w

    # stem Conv3x3 (pad=1, stride=1): 3 sublane-aligned row windows (ky shifts),
    # each an MXU matmul, accumulated in f32.  Patches never touch HBM.
    acc = jnp.dot(x_ref[0:hw, :], wstem_ref[0],
                  preferred_element_type=jnp.float32)
    for ky in (1, 2):
        acc = acc + jnp.dot(x_ref[ky * w:ky * w + hw, :], wstem_ref[ky],
                            preferred_element_type=jnp.float32)

    # folded stem-BN o lastact-BN (eval mode) + ReLU  (f32 VPU path)
    y = jnp.maximum(acc * aff_ref[0:1, :] + aff_ref[1:2, :], 0.0)

    # lastact 1x1 conv (bf16 MXU, f32 accumulate) + trailing BN
    z = jnp.dot(y.astype(jnp.bfloat16), w1x1_ref[...],
                preferred_element_type=jnp.float32)
    z = z * aff_ref[2:3, :] + aff_ref[3:4, :]

    # classifier before the (linear) global average pool:
    #   mean_p(z_p) @ Wfc == mean_p(z_p @ Wfc)
    # keeps every matmul chunky and the pooling a single sublane reduction over
    # the already-resident tile (no extra pass over HBM).
    zw = jnp.dot(z, wfc_ref[...], preferred_element_type=jnp.float32)
    logits = jnp.sum(zw, axis=0, keepdims=True) * (1.0 / hw) + aff_ref[4:5, :]
    out_ref[...] = logits


# ----------------------------------------------------------------------------
# Wrapper
# ----------------------------------------------------------------------------
@functools.partial(jax.jit, static_argnums=(2,))
def master_network_forward(x_nchw, params, num_classes):
    n, cin, h, w = x_nchw.shape
    wstem = params["w_stem_p"]        # (3, Cpad, 128) bf16
    w1x1 = params["w_1x1_p"]          # (128, 128)     bf16
    wfc = params["w_fc_p"]            # (128, 128)     f32
    affine = params["affine"]         # (8, 128)       f32
    cpad = wstem.shape[1]
    c0p, fp, ncp = wstem.shape[-1], w1x1.shape[-1], wfc.shape[-1]
    cpack = 3 * cin

    # NCHW -> NHWC, conv padding, fold kx-shifts into channels, flatten rows so
    # each ky-shift is a contiguous, sublane-aligned row window in the kernel.
    # (~3x copy of the *tiny* input, NOT the 9x row-expanded im2col matrix.)
    x_nhwc = jnp.transpose(x_nchw, (0, 2, 3, 1))
    xp = jnp.pad(x_nhwc, ((0, 0), (1, 1), (1, 1), (0, 0)))
    xw = jnp.concatenate([xp[:, :, kx:kx + w, :] for kx in range(3)], axis=-1)
    xw = jnp.pad(xw, ((0, 0), (0, 0), (0, 0), (0, cpad - cpack)))
    xw = xw.reshape(n, (h + 2) * w, cpad).astype(jnp.bfloat16)

    kernel = functools.partial(_fused_forward_kernel, h, w)
    out = pl.pallas_call(
        kernel,
        out_shape=jax.ShapeDtypeStruct((n, 1, ncp), jnp.float32),
        grid=(n,),
        in_specs=[
            pl.BlockSpec((None, (h + 2) * w, cpad), lambda i: (i, 0, 0)),
            pl.BlockSpec((3, cpad, c0p), lambda i: (0, 0, 0)),
            pl.BlockSpec((c0p, fp), lambda i: (0, 0)),
            pl.BlockSpec((fp, ncp), lambda i: (0, 0)),
            pl.BlockSpec((8, LANE), lambda i: (0, 0)),
        ],
        out_specs=pl.BlockSpec((None, 1, ncp), lambda i: (i, 0, 0)),
        compiler_params=pltpu.CompilerParams(
            dimension_semantics=("parallel",),      # v7x: shard images over TCs
            vmem_limit_bytes=32 * 1024 * 1024,      # explicit, portable budget
        ),
    )(xw, wstem, w1x1, wfc, affine)
    return out[:, 0, :num_classes]


# ----------------------------------------------------------------------------
# Pure-JAX references
# ----------------------------------------------------------------------------
def reference_forward_f32(x_nchw, params):
    """Exact eval-mode MasterNetwork math (stem -> lastact -> pool -> fc), f32."""
    eps = 1e-5
    x = jnp.transpose(x_nchw, (0, 2, 3, 1))
    n, h, w, cin = x.shape
    xp = jnp.pad(x, ((0, 0), (1, 1), (1, 1), (0, 0)))
    wst = params["w_stem"]
    feat = jnp.zeros((n, h, w, wst.shape[-1]), jnp.float32)
    for ky in range(3):
        for kx in range(3):
            feat = feat + jnp.einsum("nhwc,cd->nhwd",
                                     xp[:, ky:ky + h, kx:kx + w, :],
                                     wst[ky, kx],
                                     precision=lax.Precision.HIGHEST)
    bn = lambda t: t / math.sqrt(1.0 + eps)   # gamma=1, beta=0, mean=0, var=1
    y = jnp.maximum(bn(bn(feat)), 0.0)
    z = bn(jnp.einsum("nhwc,cf->nhwf", y, params["w_1x1"],
                      precision=lax.Precision.HIGHEST))
    pooled = z.mean(axis=(1, 2))
    return jnp.dot(pooled, params["w_fc_t"],
                   precision=lax.Precision.HIGHEST) + params["b_fc"]


def reference_forward_matched(x_nchw, params):
    """Same math, mirroring the kernel's numerics (folded eval-mode BNs,
    bf16-fed MXU, f32 accumulation) for a tight-tolerance check."""
    eps = 1e-5
    s = 1.0 / math.sqrt(1.0 + eps)
    x = jnp.transpose(x_nchw, (0, 2, 3, 1))
    n, h, w, cin = x.shape
    xp = jnp.pad(x, ((0, 0), (1, 1), (1, 1), (0, 0))).astype(jnp.bfloat16)
    wst = params["w_stem"].astype(jnp.bfloat16)
    acc = jnp.zeros((n, h, w, wst.shape[-1]), jnp.float32)
    for ky in range(3):
        for kx in range(3):
            acc = acc + jnp.einsum("nhwc,cd->nhwd",
                                   xp[:, ky:ky + h, kx:kx + w, :],
                                   wst[ky, kx],
                                   preferred_element_type=jnp.float32)
    y = jnp.maximum(acc * (s * s), 0.0)
    z = jnp.einsum("nhwc,cf->nhwf", y.astype(jnp.bfloat16),
                   params["w_1x1"].astype(jnp.bfloat16),
                   preferred_element_type=jnp.float32) * s
    pooled = z.mean(axis=(1, 2))
    return jnp.dot(pooled, params["w_fc_t"],
                   precision=lax.Precision.HIGHEST) + params["b_fc"]


# ----------------------------------------------------------------------------
# Deterministic parameters (mirrors MasterNetwork.init_parameters, eval mode)
# ----------------------------------------------------------------------------
def build_params(key, cin, c0, f_dim, num_classes):
    gain = 3.26033
    eps = 1e-5
    k1, k2, k3 = jax.random.split(key, 3)

    # stem: Conv2d(cin, c0, 3, padding=1, bias=False) -- xavier_normal(gain)
    std_stem = gain * math.sqrt(2.0 / (cin * 9 + c0 * 9))
    w_stem = jax.random.normal(k1, (3, 3, cin, c0), jnp.float32) * std_stem

    # lastact: Conv2d(c0, f_dim, 1, bias=False) -- xavier_normal(gain)
    std_1x1 = gain * math.sqrt(2.0 / (c0 + f_dim))
    w_1x1 = jax.random.normal(k2, (c0, f_dim), jnp.float32) * std_1x1

    # classifier: Linear(f_dim, num_classes) -- normal(0, gain*sqrt(2/(out+in)))
    std_fc = gain * math.sqrt(2.0 / (num_classes + f_dim))
    w_fc = jax.random.normal(k3, (num_classes, f_dim), jnp.float32) * std_fc
    b_fc = jnp.zeros((num_classes,), jnp.float32)

    # eval-mode BatchNorm with default stats: y = x / sqrt(1 + eps).
    # stem BN and the first lastact BN are consecutive per-channel affines with
    # no cells in between -> fold into one scale (shifts stay 0).
    s_bn = 1.0 / math.sqrt(1.0 + eps)

    cpack = 3 * cin
    cpad = ((cpack + 7) // 8) * 8            # sublane-friendly contraction dim

    # ---- lane-padded / packed tensors consumed by the Pallas kernel ----
    w_stem_p = jnp.zeros((3, cpad, LANE), jnp.float32)
    w_stem_p = w_stem_p.at[:, :cpack, :c0].set(
        w_stem.reshape(3, cpack, c0)).astype(jnp.bfloat16)
    w_1x1_p = (jnp.zeros((LANE, LANE), jnp.float32)
               .at[:c0, :f_dim].set(w_1x1).astype(jnp.bfloat16))
    w_fc_p = (jnp.zeros((LANE, LANE), jnp.float32)
              .at[:f_dim, :num_classes].set(w_fc.T))          # tiny: keep f32

    affine = jnp.zeros((8, LANE), jnp.float32)
    affine = affine.at[0, :c0].set(s_bn * s_bn)     # folded BN0 o BN1 scale
    affine = affine.at[2, :f_dim].set(s_bn)         # trailing BN scale
    affine = affine.at[4, :num_classes].set(b_fc)   # classifier bias (zeros)
    # rows 1 and 3 (shifts) stay 0; rows 5-7 are padding.

    return {
        # kernel-side (padded, packed)
        "w_stem_p": w_stem_p, "w_1x1_p": w_1x1_p, "w_fc_p": w_fc_p,
        "affine": affine,
        # reference-side (unpadded, f32)
        "w_stem": w_stem, "w_1x1": w_1x1, "w_fc_t": w_fc.T, "b_fc": b_fc,
    }


if __name__ == "__main__":
    # MasterNetwork config: layer_channels=[16], layer_stride=[1],
    # layer_repeats=[0] (empty cell stack), final_concat_layer=32,
    # num_classes=10, stem_stride=1, eval-mode BatchNorm with default stats.
    CIN, C0, F_DIM, NUM_CLASSES = 3, 16, 32, 10
    N, H, W = 2, 16, 16

    key = jax.random.PRNGKey(0)
    k_x, k_p = jax.random.split(key)
    x = jax.random.normal(k_x, (N, CIN, H, W), jnp.float32)   # NCHW like PyTorch
    params = build_params(k_p, CIN, C0, F_DIM, NUM_CLASSES)

    logits = jax.block_until_ready(master_network_forward(x, params, NUM_CLASSES))
    assert logits.shape == (N, NUM_CLASSES)

    ref_match = jax.block_until_ready(reference_forward_matched(x, params))
    ref_f32 = jax.block_until_ready(reference_forward_f32(x, params))

    err_m = float(jnp.max(jnp.abs(logits - ref_match)))
    err_f = float(jnp.max(jnp.abs(logits - ref_f32)))
    # tight check vs. a reference with identical numerics (bf16 MXU feeds, f32 accum)
    assert jnp.allclose(logits, ref_match, atol=2e-3, rtol=2e-3), \
        f"matched-ref max abs err {err_m}"
    # sanity check vs. full-f32 eval-mode math (loose: covers bf16 MXU rounding)
    assert jnp.allclose(logits, ref_f32, atol=1e-1, rtol=1e-1), \
        f"f32-ref max abs err {err_f}"
    print("KERNEL_OK")
</pallas_src>

<mosaic_0001>
module attributes {stable_mosaic.version = 11 : i64} {
  func.func @_fused_forward_kernel(%arg0: i32, %arg1: memref<1x288x16xbf16, #tpu.memory_space<vmem>>, %arg2: memref<3x16x128xbf16, #tpu.memory_space<vmem>>, %arg3: memref<128x128xbf16, #tpu.memory_space<vmem>>, %arg4: memref<128x128xf32, #tpu.memory_space<vmem>>, %arg5: memref<8x128xf32, #tpu.memory_space<vmem>>, %arg6: memref<1x1x128xf32, #tpu.memory_space<vmem>>) attributes {dimension_semantics = [#tpu.dimension_semantics<parallel>], iteration_bounds = array<i64: 2>, scalar_prefetch = 0 : i64, scratch_operands = 0 : i64, tpu.core_type = #tpu.core_type<tc>, window_params = [{transform_indices = @transform_0, window_bounds = array<i64: 1, 288, 16>}, {pipeline_mode = #tpu.pipeline_mode<synchronous>, transform_indices = @transform_1, window_bounds = array<i64: 3, 16, 128>}, {pipeline_mode = #tpu.pipeline_mode<synchronous>, transform_indices = @transform_2, window_bounds = array<i64: 128, 128>}, {pipeline_mode = #tpu.pipeline_mode<synchronous>, transform_indices = @transform_3, window_bounds = array<i64: 128, 128>}, {pipeline_mode = #tpu.pipeline_mode<synchronous>, transform_indices = @transform_4, window_bounds = array<i64: 8, 128>}, {transform_indices = @transform_5, window_bounds = array<i64: 1, 1, 128>}]} {
    %c0 = arith.constant 0 : index
    %c0_0 = arith.constant 0 : index
    %c0_1 = arith.constant 0 : index
    %0 = vector.load %arg1[%c0, %c0_0, %c0_1] : memref<1x288x16xbf16, #tpu.memory_space<vmem>>, vector<1x256x16xbf16>
    %1 = vector.shape_cast %0 : vector<1x256x16xbf16> to vector<256x16xbf16>
    %c0_2 = arith.constant 0 : index
    %c0_3 = arith.constant 0 : index
    %c0_4 = arith.constant 0 : index
    %2 = vector.load %arg2[%c0_2, %c0_3, %c0_4] : memref<3x16x128xbf16, #tpu.memory_space<vmem>>, vector<1x16x128xbf16>
    %3 = vector.shape_cast %2 : vector<1x16x128xbf16> to vector<16x128xbf16>
    %cst = arith.constant dense<0.000000e+00> : vector<256x128xf32>
    %4 = tpu.matmul %1, %3, %cst {dimension_numbers = #tpu.dot_dimension_numbers<[1], [0], [0], [1], [0, 0, 1, 1], [], []>} : vector<256x16xbf16>, vector<16x128xbf16>, vector<256x128xf32> -> vector<256x128xf32>
    %c0_5 = arith.constant 0 : index
    %c16 = arith.constant 16 : index
    %c0_6 = arith.constant 0 : index
    %5 = vector.load %arg1[%c0_5, %c16, %c0_6] : memref<1x288x16xbf16, #tpu.memory_space<vmem>>, vector<1x256x16xbf16>
    %6 = vector.shape_cast %5 : vector<1x256x16xbf16> to vector<256x16xbf16>
    %c1 = arith.constant 1 : index
    %c0_7 = arith.constant 0 : index
    %c0_8 = arith.constant 0 : index
    %7 = vector.load %arg2[%c1, %c0_7, %c0_8] : memref<3x16x128xbf16, #tpu.memory_space<vmem>>, vector<1x16x128xbf16>
    %8 = vector.shape_cast %7 : vector<1x16x128xbf16> to vector<16x128xbf16>
    %cst_9 = arith.constant dense<0.000000e+00> : vector<256x128xf32>
    %9 = tpu.matmul %6, %8, %cst_9 {dimension_numbers = #tpu.dot_dimension_numbers<[1], [0], [0], [1], [0, 0, 1, 1], [], []>} : vector<256x16xbf16>, vector<16x128xbf16>, vector<256x128xf32> -> vector<256x128xf32>
    %10 = arith.addf %4, %9 : vector<256x128xf32>
    %c0_10 = arith.constant 0 : index
    %c32 = arith.constant 32 : index
    %c0_11 = arith.constant 0 : index
    %11 = vector.load %arg1[%c0_10, %c32, %c0_11] : memref<1x288x16xbf16, #tpu.memory_space<vmem>>, vector<1x256x16xbf16>
    %12 = vector.shape_cast %11 : vector<1x256x16xbf16> to vector<256x16xbf16>
    %c2 = arith.constant 2 : index
    %c0_12 = arith.constant 0 : index
    %c0_13 = arith.constant 0 : index
    %13 = vector.load %arg2[%c2, %c0_12, %c0_13] : memref<3x16x128xbf16, #tpu.memory_space<vmem>>, vector<1x16x128xbf16>
    %14 = vector.shape_cast %13 : vector<1x16x128xbf16> to vector<16x128xbf16>
    %cst_14 = arith.constant dense<0.000000e+00> : vector<256x128xf32>
    %15 = tpu.matmul %12, %14, %cst_14 {dimension_numbers = #tpu.dot_dimension_numbers<[1], [0], [0], [1], [0, 0, 1, 1], [], []>} : vector<256x16xbf16>, vector<16x128xbf16>, vector<256x128xf32> -> vector<256x128xf32>
    %16 = arith.addf %10, %15 : vector<256x128xf32>
    %c0_15 = arith.constant 0 : index
    %c0_16 = arith.constant 0 : index
    %17 = vector.load %arg5[%c0_15, %c0_16] : memref<8x128xf32, #tpu.memory_space<vmem>>, vector<1x128xf32>
    %18 = vector.broadcast %17 : vector<1x128xf32> to vector<256x128xf32>
    %19 = arith.mulf %16, %18 : vector<256x128xf32>
    %c1_17 = arith.constant 1 : index
    %c0_18 = arith.constant 0 : index
    %20 = vector.load %arg5[%c1_17, %c0_18] : memref<8x128xf32, #tpu.memory_space<vmem>>, vector<1x128xf32>
    %21 = vector.broadcast %20 : vector<1x128xf32> to vector<256x128xf32>
    %22 = arith.addf %19, %21 : vector<256x128xf32>
    %cst_19 = arith.constant 0.000000e+00 : f32
    %23 = vector.broadcast %cst_19 : f32 to vector<256x128xf32>
    %24 = arith.maximumf %22, %23 : vector<256x128xf32>
    %25 = arith.truncf %24 : vector<256x128xf32> to vector<256x128xbf16>
    %c0_20 = arith.constant 0 : index
    %c0_21 = arith.constant 0 : index
    %26 = vector.load %arg3[%c0_20, %c0_21] : memref<128x128xbf16, #tpu.memory_space<vmem>>, vector<128x128xbf16>
    %cst_22 = arith.constant dense<0.000000e+00> : vector<256x128xf32>
    %27 = tpu.matmul %25, %26, %cst_22 {dimension_numbers = #tpu.dot_dimension_numbers<[1], [0], [0], [1], [0, 0, 1, 1], [], []>} : vector<256x128xbf16>, vector<128x128xbf16>, vector<256x128xf32> -> vector<256x128xf32>
    %c2_23 = arith.constant 2 : index
    %c0_24 = arith.constant 0 : index
    %28 = vector.load %arg5[%c2_23, %c0_24] : memref<8x128xf32, #tpu.memory_space<vmem>>, vector<1x128xf32>
    %29 = vector.broadcast %28 : vector<1x128xf32> to vector<256x128xf32>
    %30 = arith.mulf %27, %29 : vector<256x128xf32>
    %c3 = arith.constant 3 : index
    %c0_25 = arith.constant 0 : index
    %31 = vector.load %arg5[%c3, %c0_25] : memref<8x128xf32, #tpu.memory_space<vmem>>, vector<1x128xf32>
    %32 = vector.broadcast %31 : vector<1x128xf32> to vector<256x128xf32>
    %33 = arith.addf %30, %32 : vector<256x128xf32>
    %c0_26 = arith.constant 0 : index
    %c0_27 = arith.constant 0 : index
    %34 = vector.load %arg4[%c0_26, %c0_27] : memref<128x128xf32, #tpu.memory_space<vmem>>, vector<128x128xf32>
    %cst_28 = arith.constant dense<0.000000e+00> : vector<256x128xf32>
    %35 = tpu.matmul %33, %34, %cst_28 {dimension_numbers = #tpu.dot_dimension_numbers<[1], [0], [0], [1], [0, 0, 1, 1], [], []>} : vector<256x128xf32>, vector<128x128xf32>, vector<256x128xf32> -> vector<256x128xf32>
    %cst_29 = arith.constant dense<0.000000e+00> : vector<128xf32>
    %36 = vector.multi_reduction <add>, %35, %cst_29 [0] : vector<256x128xf32> to vector<128xf32>
    %37 = vector.shape_cast %36 : vector<128xf32> to vector<1x128xf32>
    %cst_30 = arith.constant 3.906250e-03 : f32
    %38 = vector.broadcast %cst_30 : f32 to vector<1x128xf32>
    %39 = arith.mulf %37, %38 : vector<1x128xf32>
    %c4 = arith.constant 4 : index
    %c0_31 = arith.constant 0 : index
    %40 = vector.load %arg5[%c4, %c0_31] : memref<8x128xf32, #tpu.memory_space<vmem>>, vector<1x128xf32>
    %41 = arith.addf %39, %40 : vector<1x128xf32>
    %c0_32 = arith.constant 0 : index
    %c0_33 = arith.constant 0 : index
    %c0_34 = arith.constant 0 : index
    %42 = vector.load %arg6[%c0_32, %c0_33, %c0_34] : memref<1x1x128xf32, #tpu.memory_space<vmem>>, vector<1x1x128xf32>
    %43 = vector.shape_cast %42 : vector<1x1x128xf32> to vector<1x128xf32>
    %44 = vector.shape_cast %41 : vector<1x128xf32> to vector<1x1x128xf32>
    tpu.vector_store %arg6[%c0_32, %c0_33, %c0_34], %44 {strides = array<i32>} : memref<1x1x128xf32, #tpu.memory_space<vmem>>, vector<1x1x128xf32>,
    return
  }
  func.func @transform_0(%arg0: i32) -> (i32, i32, i32) {
    %c0_i32 = arith.constant 0 : i32
    %c0_i32_0 = arith.constant 0 : i32
    %c0_i32_1 = arith.constant 0 : i32
    return %arg0, %c0_i32, %c0_i32_0 : i32, i32, i32
  }
  func.func @transform_1(%arg0: i32) -> (i32, i32, i32) {
    %c0_i32 = arith.constant 0 : i32
    %c0_i32_0 = arith.constant 0 : i32
    %c0_i32_1 = arith.constant 0 : i32
    %c0_i32_2 = arith.constant 0 : i32
    return %c0_i32, %c0_i32_0, %c0_i32_1 : i32, i32, i32
  }
  func.func @transform_2(%arg0: i32) -> (i32, i32) {
    %c0_i32 = arith.constant 0 : i32
    %c0_i32_0 = arith.constant 0 : i32
    %c0_i32_1 = arith.constant 0 : i32
    return %c0_i32, %c0_i32_0 : i32, i32
  }
  func.func @transform_3(%arg0: i32) -> (i32, i32) {
    %c0_i32 = arith.constant 0 : i32
    %c0_i32_0 = arith.constant 0 : i32
    %c0_i32_1 = arith.constant 0 : i32
    return %c0_i32, %c0_i32_0 : i32, i32
  }
  func.func @transform_4(%arg0: i32) -> (i32, i32) {
    %c0_i32 = arith.constant 0 : i32
    %c0_i32_0 = arith.constant 0 : i32
    %c0_i32_1 = arith.constant 0 : i32
    return %c0_i32, %c0_i32_0 : i32, i32
  }
  func.func @transform_5(%arg0: i32) -> (i32, i32, i32) {
    %c0_i32 = arith.constant 0 : i32
    %c0_i32_0 = arith.constant 0 : i32
    %c0_i32_1 = arith.constant 0 : i32
    return %arg0, %c0_i32, %c0_i32_0 : i32, i32, i32
  }
}

</mosaic_0001>

<llo_original>
// kernel: master_network_forward.1
$region0: #{master_network_forward.1}
  #allocation0 [shape = 'u32[]', space=smem, size = 0x4, offset = 0x4, fixed_abs, tag = 'smem constant byte address 0x4 - core index']
  #allocation1 [shape = 'u32[144,128]{1,0:T(1,128)}', space=vmem, size = 0x12000, scoped, tag = 'internal scratch']
  %s0 = inlined_call_operand.vmem [shape: bf16[2,288,16], index: 0, kind: input, shape index: {}]
  %s1 = inlined_call_operand.vmem [shape: bf16[3,16,128], index: 1, kind: input, shape index: {}]
  %s2 = inlined_call_operand.vmem [shape: bf16[128,128], index: 2, kind: input, shape index: {}]
  %s3 = inlined_call_operand.vmem [shape: f32[128,128], index: 3, kind: input, shape index: {}]
  %s4 = inlined_call_operand.vmem [shape: f32[8,128], index: 4, kind: input, shape index: {}]
  %s5 = inlined_call_operand.hbm [shape: f32[2,1,128], index: 5, kind: output, shape index: {}]
  %s6 = sld [smem:[#allocation0]]
  $region53: #{master_network_forward.1} parent=0
    _
  %s8 = ssub.s32 1, %s6
  %s9 = scalar_select 0, %s8, %s6
  $region1: #{master_network_forward.1} parent=0
    #allocation2 [shape = 'u8[1024]{0}', space=vmem, size = 0x400, scoped, tag = 'output window, operand 0']
    #allocation3 [shape = 's32[2]{0}', space=sflag, size = 0x8, scoped, tag = 'scoped memory for master_network_forward.1']
    %10 = vsyncpa [#allocation3], 0
    %s11 = scalar_lea.sflag [#allocation3], 1
    %12 = vsyncpa %s11, 0
    loop: start=0, step=1, limit=4
    $region2: #{master_network_forward.1} parent=1 // loop_pre_header
      _
    $region3: #{master_network_forward.1} parent=1 // loop_header
      %s14 = sphi 0, %s18
      %p15 = scmp.ge.s32.totalorder %s14, 4
      %s24 = sphi 0, %s26
      %s27 = sphi 0, %s24
      %s28 = sphi 0, %s27
      %s44 = sphi 0, %s28
      %s48 = sphi 0, %s48
      %s50 = sphi 0, %s48
      %s51 = sphi 0, %s50
      %s65 = sphi 0, %s51
      %s69 = sphi 0, %s69
      %s71 = sphi 0, %s69
      %s72 = sphi 0, %s71
      %s86 = sphi 0, %s72
      %s90 = sphi 0, %s90
      %s92 = sphi 0, %s90
      %s93 = sphi 0, %s92
      %s107 = sphi 0, %s93
      %s111 = sphi 0, %s111
      %s113 = sphi 0, %s111
      %s114 = sphi 0, %s113
      %s128 = sphi 0, %s114
      %s134 = sphi 0, %s136
      %s137 = sphi 0, %s134
      %s138 = sphi 0, %s137
      %s154 = sphi 0, %s138
    $region4: #{master_network_forward.1} parent=1 // loop_header_branch
      %17 = sbr.rel (%p15) target = $region8
    $region5: #{master_network_forward.1} parent=1 // loop_body
      %s19 = ssub.s32 %s14, 1
      %s20 = ssub.s32 %s14, 2
      %s21 = sadd.s32 %s14, 1
      %s22 = ssub.s32 %s14, %s21
      %p23 = scmp.eq.s32.totalorder %s22, 0
      %s25 = sadd.s32 %s24, 1
      %s26 = scalar_select %p23, %s24, %s25
      %p29 = pneg %p23
      %p30 = scmp.eq.s32.totalorder %s14, 1
      %p31 = por %p29, %p30
      %p32 = scmp.ne.s32.totalorder %s24, %s27
      %p33 = scmp.eq.s32.totalorder %s14, 0
      %p34 = por %p32, %p33
      %p35 = scmp.ne.s32.totalorder %s24, %s27
      %p36 = scmp.eq.s32.totalorder %s19, 1
      %p37 = por %p35, %p36
      %p38 = scmp.ne.s32.totalorder %s27, %s28
      %p39 = scmp.eq.s32.totalorder %s19, 0
      %p40 = por %p38, %p39
      %p41 = scmp.ne.s32.totalorder %s27, %s28
      %p42 = scmp.eq.s32.totalorder %s20, 1
      %p43 = por %p41, %p42
      %p45 = scmp.ne.s32.totalorder %s28, %s44
      %p46 = scmp.eq.s32.totalorder %s20, 0
      %p47 = por %p45, %p46
      %s49 = sadd.s32 %s48, 1
      %p52 = scmp.eq.s32.totalorder %s14, 1
      %p53 = scmp.ne.s32.totalorder %s48, %s50
      %p54 = scmp.eq.s32.totalorder %s14, 0
      %p55 = por %p53, %p54
      %p56 = scmp.ne.s32.totalorder %s48, %s50
      %p57 = scmp.eq.s32.totalorder %s19, 1
      %p58 = por %p56, %p57
      %p59 = scmp.ne.s32.totalorder %s50, %s51
      %p60 = scmp.eq.s32.totalorder %s19, 0
      %p61 = por %p59, %p60
      %p62 = scmp.ne.s32.totalorder %s50, %s51
      %p63 = scmp.eq.s32.totalorder %s20, 1
      %p64 = por %p62, %p63
      %p66 = scmp.ne.s32.totalorder %s51, %s65
      %p67 = scmp.eq.s32.totalorder %s20, 0
      %p68 = por %p66, %p67
      %s70 = sadd.s32 %s69, 1
      %p73 = scmp.eq.s32.totalorder %s14, 1
      %p74 = scmp.ne.s32.totalorder %s69, %s71
      %p75 = scmp.eq.s32.totalorder %s14, 0
      %p76 = por %p74, %p75
      %p77 = scmp.ne.s32.totalorder %s69, %s71
      %p78 = scmp.eq.s32.totalorder %s19, 1
      %p79 = por %p77, %p78
      %p80 = scmp.ne.s32.totalorder %s71, %s72
      %p81 = scmp.eq.s32.totalorder %s19, 0
      %p82 = por %p80, %p81
      %p83 = scmp.ne.s32.totalorder %s71, %s72
      %p84 = scmp.eq.s32.totalorder %s20, 1
      %p85 = por %p83, %p84
      %p87 = scmp.ne.s32.totalorder %s72, %s86
      %p88 = scmp.eq.s32.totalorder %s20, 0
      %p89 = por %p87, %p88
      %s91 = sadd.s32 %s90, 1
      %p94 = scmp.eq.s32.totalorder %s14, 1
      %p95 = scmp.ne.s32.totalorder %s90, %s92
      %p96 = scmp.eq.s32.totalorder %s14, 0
      %p97 = por %p95, %p96
      %p98 = scmp.ne.s32.totalorder %s90, %s92
      %p99 = scmp.eq.s32.totalorder %s19, 1
      %p100 = por %p98, %p99
      %p101 = scmp.ne.s32.totalorder %s92, %s93
      %p102 = scmp.eq.s32.totalorder %s19, 0
      %p103 = por %p101, %p102
      %p104 = scmp.ne.s32.totalorder %s92, %s93
      %p105 = scmp.eq.s32.totalorder %s20, 1
      %p106 = por %p104, %p105
      %p108 = scmp.ne.s32.totalorder %s93, %s107
      %p109 = scmp.eq.s32.totalorder %s20, 0
      %p110 = por %p108, %p109
      %s112 = sadd.s32 %s111, 1
      %p115 = scmp.eq.s32.totalorder %s14, 1
      %p116 = scmp.ne.s32.totalorder %s111, %s113
      %p117 = scmp.eq.s32.totalorder %s14, 0
      %p118 = por %p116, %p117
      %p119 = scmp.ne.s32.totalorder %s111, %s113
      %p120 = scmp.eq.s32.totalorder %s19, 1
      %p121 = por %p119, %p120
      %p122 = scmp.ne.s32.totalorder %s113, %s114
      %p123 = scmp.eq.s32.totalorder %s19, 0
      %p124 = por %p122, %p123
      %p125 = scmp.ne.s32.totalorder %s113, %s114
      %p126 = scmp.eq.s32.totalorder %s20, 1
      %p127 = por %p125, %p126
      %p129 = scmp.ne.s32.totalorder %s114, %s128
      %p130 = scmp.eq.s32.totalorder %s20, 0
      %p131 = por %p129, %p130
      %s132 = ssub.s32 %s14, %s21
      %p133 = scmp.eq.s32.totalorder %s132, 0
      %s135 = sadd.s32 %s134, 1
      %s136 = scalar_select %p133, %s134, %s135
      %p139 = pneg %p133
      %p140 = scmp.eq.s32.totalorder %s14, 1
      %p141 = por %p139, %p140
      %p142 = scmp.ne.s32.totalorder %s134, %s137
      %p143 = scmp.eq.s32.totalorder %s14, 0
      %p144 = por %p142, %p143
      %p145 = scmp.ne.s32.totalorder %s134, %s137
      %p146 = scmp.eq.s32.totalorder %s19, 1
      %p147 = por %p145, %p146
      %p148 = scmp.ne.s32.totalorder %s137, %s138
      %p149 = scmp.eq.s32.totalorder %s19, 0
      %p150 = por %p148, %p149
      %p151 = scmp.ne.s32.totalorder %s137, %s138
      %p152 = scmp.eq.s32.totalorder %s20, 1
      %p153 = por %p151, %p152
      %p155 = scmp.ne.s32.totalorder %s138, %s154
      %p156 = scmp.eq.s32.totalorder %s20, 0
      %p157 = por %p155, %p156
      %p158 = scmp.le.s32.totalorder 1, %s14
      %p159 = scmp.lt.s32.totalorder %s14, 3
      %p160 = pnand %p158, %p159
      %p161 = pneg %p160
      // Predicated region
      $region9: #{master_network_forward.1} parent=5 // pred_check
        _
      $region10: #{master_network_forward.1} parent=5 // pred_check_branch
        %163 = sbr.rel (%p160) target = $region12
      $region11: #{master_network_forward.1} parent=5 // pred_region
        %s164 = ssub.s32 %s14, 1
        // Predicated region
        $region13: #{master_network_forward.1} parent=11 // pred_check
          %p165 = pneg %p61
        $region14: #{master_network_forward.1} parent=11 // pred_check_branch
          %167 = sbr.rel (%p165) target = $region16
        $region15: #{master_network_forward.1} parent=11 // pred_region
          _
        $region16: #{master_network_forward.1} parent=11 // pred_fallthru
          _
        // Predicated region
        $region17: #{master_network_forward.1} parent=11 // pred_check
          %p168 = pneg %p82
        $region18: #{master_network_forward.1} parent=11 // pred_check_branch
          %170 = sbr.rel (%p168) target = $region20
        $region19: #{master_network_forward.1} parent=11 // pred_region
          _
        $region20: #{master_network_forward.1} parent=11 // pred_fallthru
          _
        // Predicated region
        $region21: #{master_network_forward.1} parent=11 // pred_check
          %p171 = pneg %p103
        $region22: #{master_network_forward.1} parent=11 // pred_check_branch
          %173 = sbr.rel (%p171) target = $region24
        $region23: #{master_network_forward.1} parent=11 // pred_region
          _
        $region24: #{master_network_forward.1} parent=11 // pred_fallthru
          _
        // Predicated region
        $region25: #{master_network_forward.1} parent=11 // pred_check
          %p174 = pneg %p124
        $region26: #{master_network_forward.1} parent=11 // pred_check_branch
          %176 = sbr.rel (%p174) target = $region28
        $region27: #{master_network_forward.1} parent=11 // pred_region
          _
        $region28: #{master_network_forward.1} parent=11 // pred_fallthru
          _
      $region12: #{master_network_forward.1} parent=5 // pred_fallthru
        _
      %p177 = scmp.lt.s32.totalorder %s14, 2
      // Predicated region
      $region29: #{master_network_forward.1} parent=5 // pred_check
        %p178 = pneg %p177
      $region30: #{master_network_forward.1} parent=5 // pred_check_branch
        %180 = sbr.rel (%p178) target = $region32
      $region31: #{master_network_forward.1} parent=5 // pred_region
        // Predicated region
        $region33: #{master_network_forward.1} parent=31 // pred_check
          %p181 = pneg %p34
        $region34: #{master_network_forward.1} parent=31 // pred_check_branch
          %183 = sbr.rel (%p181) target = $region36
        $region35: #{master_network_forward.1} parent=31 // pred_region
          %p184 = scmp.lt.s32.totalorder %s14, 1
          %s185 = scalar_select %p184, %s14, 1
          %s186 = smul.addr %s185, 36
          %s187 = smul.addr %s186, 4
          %s188 = scalar_lea.vmem %s0, %s187
        $region36: #{master_network_forward.1} parent=31 // pred_fallthru
          _
      $region32: #{master_network_forward.1} parent=5 // pred_fallthru
        _
      %p189 = scmp.le.s32.totalorder 1, %s14
      %p190 = scmp.lt.s32.totalorder %s14, 3
      %p191 = pnand %p189, %p190
      %p192 = pneg %p191
      // Predicated region
      $region37: #{master_network_forward.1} parent=5 // pred_check
        _
      $region38: #{master_network_forward.1} parent=5 // pred_check_branch
        %194 = sbr.rel (%p191) target = $region40
      $region39: #{master_network_forward.1} parent=5 // pred_region
        %s195 = ssub.s32 %s14, 1
        %p196 = scmp.lt.s32.totalorder %s19, 1
        %s197 = scalar_select %p196, %s19, 1
        %s198 = smul.addr %s197, 36
        %s199 = smul.addr %s198, 4
        %s200 = scalar_lea.vmem %s0, %s199
        %p201 = pneg %p40
        %p202 = pneg %p37
        %p203 = pneg %p61
        %p204 = pneg %p58
        %p205 = pneg %p82
        %p206 = pneg %p79
        %p207 = pneg %p103
        %p208 = pneg %p100
        %p209 = pneg %p124
        %p210 = pneg %p121
        %p211 = pneg %p150
        %p212 = pneg %p147
        %s213 = sand.u32 %s137, 1
        %s214 = scalar_lea.sflag [#allocation3], %s213
        %s215 = sand.u32 %s137, 1
        %s216 = scalar_lea.vmem [#allocation2], %s215
        %p217 = scmp.lt.s32.totalorder %s19, 1
        %s218 = scalar_select %p217, %s19, 1
        %s219 = smul.addr %s218, 36
        %s220 = smul.addr %s219, 4
        %s221 = scalar_lea.vmem %s0, %s220
        %v223 = vld [vmem:[%s221] sm:$0xf]
        %v224 = vld [vmem:[%s221 + $0x4] sm:$0xf]
        %v225 = vld [vmem:[%s221 + $0x8] sm:$0xf]
        %v226 = vld [vmem:[%s221 + $0xc] sm:$0xf]
        %v227 = vld [vmem:[%s221 + $0x10] sm:$0xf]
        %v228 = vld [vmem:[%s221 + $0x14] sm:$0xf]
        %v229 = vld [vmem:[%s221 + $0x18] sm:$0xf]
        %v230 = vld [vmem:[%s221 + $0x1c] sm:$0xf]
        %v231 = vld [vmem:[%s221 + $0x20] sm:$0xf]
        %v232 = vld [vmem:[%s221 + $0x24] sm:$0xf]
        %v233 = vld [vmem:[%s221 + $0x28] sm:$0xf]
        %v234 = vld [vmem:[%s221 + $0x2c] sm:$0xf]
        %v235 = vld [vmem:[%s221 + $0x30] sm:$0xf]
        %v236 = vld [vmem:[%s221 + $0x34] sm:$0xf]
        %v237 = vld [vmem:[%s221 + $0x38] sm:$0xf]
        %v238 = vld [vmem:[%s221 + $0x3c] sm:$0xf]
        %v239 = vld [vmem:[%s221 + $0x40] sm:$0xf]
        %v240 = vld [vmem:[%s221 + $0x44] sm:$0xf]
        %v241 = vld [vmem:[%s221 + $0x48] sm:$0xf]
        %v242 = vld [vmem:[%s221 + $0x4c] sm:$0xf]
        %v243 = vld [vmem:[%s221 + $0x50] sm:$0xf]
        %v244 = vld [vmem:[%s221 + $0x54] sm:$0xf]
        %v245 = vld [vmem:[%s221 + $0x58] sm:$0xf]
        %v246 = vld [vmem:[%s221 + $0x5c] sm:$0xf]
        %v247 = vld [vmem:[%s221 + $0x60] sm:$0xf]
        %v248 = vld [vmem:[%s221 + $0x64] sm:$0xf]
        %v249 = vld [vmem:[%s221 + $0x68] sm:$0xf]
        %v250 = vld [vmem:[%s221 + $0x6c] sm:$0xf]
        %v251 = vld [vmem:[%s221 + $0x70] sm:$0xf]
        %v252 = vld [vmem:[%s221 + $0x74] sm:$0xf]
        %v253 = vld [vmem:[%s221 + $0x78] sm:$0xf]
        %v254 = vld [vmem:[%s221 + $0x7c] sm:$0xf]
        %v255 = vld [vmem:[%s1] sm:$0xf]
        %v256 = vld [vmem:[%s1 + $0x4] sm:$0xf]
        %v257 = vld [vmem:[%s221 + $0x80] sm:$0xf]
        %v258 = vld [vmem:[%s221 + $0x84] sm:$0xf]
        %s259 = scalar_lea.vmem %s1, 8
        %v260 = vld [vmem:[%s259] sm:$0xf]
        %v261 = vld [vmem:[%s259 + $0x4] sm:$0xf]
        %v294 = vunpack.c.l.b16 %v225
        %v295 = vunpack.c.l.b16 %v226
        %v296 = vunpack.c.l.b16 %v227
        %v297 = vunpack.c.l.b16 %v228
        %v298 = vunpack.c.l.b16 %v229
        %v299 = vunpack.c.l.b16 %v230
        %v300 = vunpack.c.l.b16 %v231
        %v301 = vunpack.c.l.b16 %v232
        %v302 = vunpack.c.l.b16 %v233
        %v303 = vunpack.c.l.b16 %v234
        %v304 = vunpack.c.l.b16 %v235
        %v305 = vunpack.c.l.b16 %v236
        %v306 = vunpack.c.l.b16 %v237
        %v307 = vunpack.c.l.b16 %v238
        %v308 = vunpack.c.l.b16 %v239
        %v309 = vunpack.c.l.b16 %v240
        %v310 = vunpack.c.l.b16 %v241
        %v311 = vunpack.c.l.b16 %v242
        %v312 = vunpack.c.l.b16 %v243
        %v313 = vunpack.c.l.b16 %v244
        %v314 = vunpack.c.l.b16 %v245
        %v315 = vunpack.c.l.b16 %v246
        %v316 = vunpack.c.l.b16 %v247
        %v317 = vunpack.c.l.b16 %v248
        %v318 = vunpack.c.l.b16 %v249
        %v319 = vunpack.c.l.b16 %v250
        %v320 = vunpack.c.l.b16 %v251
        %v321 = vunpack.c.l.b16 %v252
        %v322 = vunpack.c.l.b16 %v253
        %v323 = vunpack.c.l.b16 %v254
        %v324 = vunpack.c.l.b16 %v257
        %v325 = vunpack.c.l.b16 %v258
        %v326 = vpack.c.b16 %v295, %v294
        %v327 = vpack.c.b16 %v297, %v296
        %v328 = vpack.c.b16 %v299, %v298
        %v329 = vpack.c.b16 %v301, %v300
        %v330 = vpack.c.b16 %v303, %v302
        %v331 = vpack.c.b16 %v305, %v304
        %v332 = vpack.c.b16 %v307, %v306
        %v333 = vpack.c.b16 %v309, %v308
        %v334 = vpack.c.b16 %v311, %v310
        %v335 = vpack.c.b16 %v313, %v312
        %v336 = vpack.c.b16 %v315, %v314
        %v337 = vpack.c.b16 %v317, %v316
        %v338 = vpack.c.b16 %v319, %v318
        %v339 = vpack.c.b16 %v321, %v320
        %v340 = vpack.c.b16 %v323, %v322
        %v341 = vpack.c.b16 %v325, %v324
        %v344 = vunpack.c.l.b16 %v260
        %v345 = vunpack.c.l.b16 %v261
        %v346 = vpack.c.b16 %v345, %v344
        %vm348 = vcmask 130048
        %v350 = vsel %vm348, %v326, 0
        %v353 = vsel %vm348, %v327, 0
        %v356 = vsel %vm348, %v328, 0
        %v359 = vsel %vm348, %v329, 0
        %v362 = vsel %vm348, %v330, 0
        %v365 = vsel %vm348, %v331, 0
        %v368 = vsel %vm348, %v332, 0
        %v371 = vsel %vm348, %v333, 0
        %v374 = vsel %vm348, %v334, 0
        %v377 = vsel %vm348, %v335, 0
        %v380 = vsel %vm348, %v336, 0
        %v383 = vsel %vm348, %v337, 0
        %v386 = vsel %vm348, %v338, 0
        %v389 = vsel %vm348, %v339, 0
        %v392 = vsel %vm348, %v340, 0
        %v395 = vsel %vm348, %v341, 0
        %397 = vmatprep.subr.bf16.mxu0 0
        %398 = vmatpush1.bf16.msra.mxu0 0
        %399 = vmatprep.subr.bf16.mxu0 0
        %400 = vmatpush1.bf16.msra.mxu0 0
        %401 = vmatprep.subr.bf16.mxu0 0
        %402 = vmatpush1.bf16.msra.mxu0 0
        %403 = vmatprep.subr.bf16.mxu0 0
        %404 = vmatpush1.bf16.msra.mxu0 0
        %405 = vmatprep.subr.bf16.mxu0 0
        %406 = vmatpush1.bf16.msra.mxu0 0
        %407 = vmatprep.subr.bf16.mxu0 0
        %408 = vmatpush1.bf16.msra.mxu0 0
        %409 = vmatprep.subr.bf16.mxu0 0
        %410 = vmatpush1.bf16.msra.mxu0 0
        %411 = vmatprep.subr.bf16.mxu0 0
        %412 = vmatpush1.bf16.msra.mxu0 %v346
        %413 = vmatprep.subr.bf16.mxu0 0
        %414 = vmatpush2.bf16.msra.mxu0 0
        %415 = vmatprep.subr.bf16.mxu0 0
        %416 = vmatpush2.bf16.msra.mxu0 0
        %417 = vmatprep.subr.bf16.mxu0 0
        %418 = vmatpush2.bf16.msra.mxu0 0
        %419 = vmatprep.subr.bf16.mxu0 0
        %420 = vmatpush2.bf16.msra.mxu0 0
        %421 = vmatprep.subr.bf16.mxu0 0
        %422 = vmatpush2.bf16.msra.mxu0 0
        %423 = vmatprep.subr.bf16.mxu0 0
        %424 = vmatpush2.bf16.msra.mxu0 0
        %425 = vmatprep.subr.bf16.mxu0 0
        %426 = vmatpush2.bf16.msra.mxu0 0
        %427 = vmatprep.subr.bf16.mxu0 0
        %428 = vmatpush2.bf16.msra.mxu0 0
        %429 = vmatprep.mubr.bf16.mxu0 0
        %430 = vmatmul.mubr.bf16.gmra.mxu0 %v350
        %v431 = vpop.f32.mrf.mxu0
        %v432 = vadd.f32 0.0, %v431
        %v433 = vpop.f32.mrf.mxu0
        %v434 = vpop.f32.mrf.mxu0
        %v435 = vadd.f32 0.0, %v434
        %v436 = vpop.f32.mrf.mxu0
        %437 = vmatprep.mubr.bf16.mxu0 0
        %438 = vmatmul.mubr.bf16.gmra.mxu0 %v353
        %v439 = vpop.f32.mrf.mxu0
        %v440 = vadd.f32 0.0, %v439
        %v441 = vpop.f32.mrf.mxu0
        %v442 = vpop.f32.mrf.mxu0
        %v443 = vadd.f32 0.0, %v442
        %v444 = vpop.f32.mrf.mxu0
        %445 = vmatprep.mubr.bf16.mxu0 0
        %446 = vmatmul.mubr.bf16.gmra.mxu0 %v356
        %v447 = vpop.f32.mrf.mxu0
        %v448 = vadd.f32 0.0, %v447
        %v449 = vpop.f32.mrf.mxu0
        %v450 = vpop.f32.mrf.mxu0
        %v451 = vadd.f32 0.0, %v450
        %v452 = vpop.f32.mrf.mxu0
        %453 = vmatprep.mubr.bf16.mxu0 0
        %454 = vmatmul.mubr.bf16.gmra.mxu0 %v359
        %v455 = vpop.f32.mrf.mxu0
        %v456 = vadd.f32 0.0, %v455
        %v457 = vpop.f32.mrf.mxu0
        %v458 = vpop.f32.mrf.mxu0
        %v459 = vadd.f32 0.0, %v458
        %v460 = vpop.f32.mrf.mxu0
        %461 = vmatprep.mubr.bf16.mxu0 0
        %462 = vmatmul.mubr.bf16.gmra.mxu0 %v362
        %v463 = vpop.f32.mrf.mxu0
        %v464 = vadd.f32 0.0, %v463
        %v465 = vpop.f32.mrf.mxu0
        %v466 = vpop.f32.mrf.mxu0
        %v467 = vadd.f32 0.0, %v466
        %v468 = vpop.f32.mrf.mxu0
        %469 = vmatprep.mubr.bf16.mxu0 0
        %470 = vmatmul.mubr.bf16.gmra.mxu0 %v365
        %v471 = vpop.f32.mrf.mxu0
        %v472 = vadd.f32 0.0, %v471
        %v473 = vpop.f32.mrf.mxu0
        %v474 = vpop.f32.mrf.mxu0
        %v475 = vadd.f32 0.0, %v474
        %v476 = vpop.f32.mrf.mxu0
        %477 = vmatprep.mubr.bf16.mxu0 0
        %478 = vmatmul.mubr.bf16.gmra.mxu0 %v368
        %v479 = vpop.f32.mrf.mxu0
        %v480 = vadd.f32 0.0, %v479
        %v481 = vpop.f32.mrf.mxu0
        %v482 = vpop.f32.mrf.mxu0
        %v483 = vadd.f32 0.0, %v482
        %v484 = vpop.f32.mrf.mxu0
        %485 = vmatprep.mubr.bf16.mxu0 0
        %486 = vmatmul.mubr.bf16.gmra.mxu0 %v371
        %v487 = vpop.f32.mrf.mxu0
        %v488 = vadd.f32 0.0, %v487
        %v489 = vpop.f32.mrf.mxu0
        %v490 = vpop.f32.mrf.mxu0
        %v491 = vadd.f32 0.0, %v490
        %v492 = vpop.f32.mrf.mxu0
        %493 = vmatprep.mubr.bf16.mxu0 0
        %494 = vmatmul.mubr.bf16.gmra.mxu0 %v374
        %v495 = vpop.f32.mrf.mxu0
        %v496 = vadd.f32 0.0, %v495
        %v497 = vpop.f32.mrf.mxu0
        %v498 = vpop.f32.mrf.mxu0
        %v499 = vadd.f32 0.0, %v498
        %v500 = vpop.f32.mrf.mxu0
        %501 = vmatprep.mubr.bf16.mxu0 0
        %502 = vmatmul.mubr.bf16.gmra.mxu0 %v377
        %v503 = vpop.f32.mrf.mxu0
        %v504 = vadd.f32 0.0, %v503
        %v505 = vpop.f32.mrf.mxu0
        %v506 = vpop.f32.mrf.mxu0
        %v507 = vadd.f32 0.0, %v506
        %v508 = vpop.f32.mrf.mxu0
        %509 = vmatprep.mubr.bf16.mxu0 0
        %510 = vmatmul.mubr.bf16.gmra.mxu0 %v380
        %v511 = vpop.f32.mrf.mxu0
        %v512 = vadd.f32 0.0, %v511
        %v513 = vpop.f32.mrf.mxu0
        %v514 = vpop.f32.mrf.mxu0
        %v515 = vadd.f32 0.0, %v514
        %v516 = vpop.f32.mrf.mxu0
        %517 = vmatprep.mubr.bf16.mxu0 0
        %518 = vmatmul.mubr.bf16.gmra.mxu0 %v383
        %v519 = vpop.f32.mrf.mxu0
        %v520 = vadd.f32 0.0, %v519
        %v521 = vpop.f32.mrf.mxu0
        %v522 = vpop.f32.mrf.mxu0
        %v523 = vadd.f32 0.0, %v522
        %v524 = vpop.f32.mrf.mxu0
        %525 = vmatprep.mubr.bf16.mxu0 0
        %526 = vmatmul.mubr.bf16.gmra.mxu0 %v386
        %v527 = vpop.f32.mrf.mxu0
        %v528 = vadd.f32 0.0, %v527
        %v529 = vpop.f32.mrf.mxu0
        %v530 = vpop.f32.mrf.mxu0
        %v531 = vadd.f32 0.0, %v530
        %v532 = vpop.f32.mrf.mxu0
        %533 = vmatprep.mubr.bf16.mxu0 0
        %534 = vmatmul.mubr.bf16.gmra.mxu0 %v389
        %v535 = vpop.f32.mrf.mxu0
        %v536 = vadd.f32 0.0, %v535
        %v537 = vpop.f32.mrf.mxu0
        %v538 = vpop.f32.mrf.mxu0
        %v539 = vadd.f32 0.0, %v538
        %v540 = vpop.f32.mrf.mxu0
        %541 = vmatprep.mubr.bf16.mxu0 0
        %542 = vmatmul.mubr.bf16.gmra.mxu0 %v392
        %v543 = vpop.f32.mrf.mxu0
        %v544 = vadd.f32 0.0, %v543
        %v545 = vpop.f32.mrf.mxu0
        %v546 = vpop.f32.mrf.mxu0
        %v547 = vadd.f32 0.0, %v546
        %v548 = vpop.f32.mrf.mxu0
        %549 = vmatprep.mubr.bf16.mxu0 0
        %550 = vmatmul.mubr.bf16.gmra.mxu0 %v395
        %v551 = vpop.f32.mrf.mxu0
        %v552 = vadd.f32 0.0, %v551
        %v553 = vpop.f32.mrf.mxu0
        %v554 = vpop.f32.mrf.mxu0
        %v555 = vadd.f32 0.0, %v554
        %v556 = vpop.f32.mrf.mxu0
        %557 = vdwg.mxu0
        %v560 = vunpack.c.l.b16 %v223
        %v561 = vunpack.c.l.b16 %v224
        %v562 = vpack.c.b16 %v561, %v560
        %v565 = vunpack.c.l.b16 %v255
        %v566 = vunpack.c.l.b16 %v256
        %v567 = vpack.c.b16 %v566, %v565
        %v570 = vsel %vm348, %v562, 0
        %572 = vmatprep.subr.bf16.mxu0 0
        %573 = vmatpush1.bf16.msra.mxu0 0
        %574 = vmatprep.subr.bf16.mxu0 0
        %575 = vmatpush1.bf16.msra.mxu0 0
        %576 = vmatprep.subr.bf16.mxu0 0
        %577 = vmatpush1.bf16.msra.mxu0 0
        %578 = vmatprep.subr.bf16.mxu0 0
        %579 = vmatpush1.bf16.msra.mxu0 0
        %580 = vmatprep.subr.bf16.mxu0 0
        %581 = vmatpush1.bf16.msra.mxu0 0
        %582 = vmatprep.subr.bf16.mxu0 0
        %583 = vmatpush1.bf16.msra.mxu0 0
        %584 = vmatprep.subr.bf16.mxu0 0
        %585 = vmatpush1.bf16.msra.mxu0 0
        %586 = vmatprep.subr.bf16.mxu0 0
        %587 = vmatpush1.bf16.msra.mxu0 %v567
        %588 = vmatprep.subr.bf16.mxu0 0
        %589 = vmatpush2.bf16.msra.mxu0 0
        %590 = vmatprep.subr.bf16.mxu0 0
        %591 = vmatpush2.bf16.msra.mxu0 0
        %592 = vmatprep.subr.bf16.mxu0 0
        %593 = vmatpush2.bf16.msra.mxu0 0
        %594 = vmatprep.subr.bf16.mxu0 0
        %595 = vmatpush2.bf16.msra.mxu0 0
        %596 = vmatprep.subr.bf16.mxu0 0
        %597 = vmatpush2.bf16.msra.mxu0 0
        %598 = vmatprep.subr.bf16.mxu0 0
        %599 = vmatpush2.bf16.msra.mxu0 0
        %600 = vmatprep.subr.bf16.mxu0 0
        %601 = vmatpush2.bf16.msra.mxu0 0
        %602 = vmatprep.subr.bf16.mxu0 0
        %603 = vmatpush2.bf16.msra.mxu0 0
        %604 = vmatprep.mubr.bf16.mxu0 0
        %605 = vmatmul.mubr.bf16.gmra.mxu0 %v570
        %v606 = vpop.f32.mrf.mxu0
        %v607 = vadd.f32 %v432, %v606
        %v608 = vpop.f32.mrf.mxu0
        %v609 = vpop.f32.mrf.mxu0
        %v610 = vadd.f32 %v435, %v609
        %v611 = vpop.f32.mrf.mxu0
        %612 = vmatprep.mubr.bf16.mxu0 0
        %613 = vmatmul.mubr.bf16.gmra.mxu0 %v350
        %v614 = vpop.f32.mrf.mxu0
        %v615 = vadd.f32 %v440, %v614
        %v616 = vpop.f32.mrf.mxu0
        %v617 = vpop.f32.mrf.mxu0
        %v618 = vadd.f32 %v443, %v617
        %v619 = vpop.f32.mrf.mxu0
        %620 = vmatprep.mubr.bf16.mxu0 0
        %621 = vmatmul.mubr.bf16.gmra.mxu0 %v353
        %v622 = vpop.f32.mrf.mxu0
        %v623 = vadd.f32 %v448, %v622
        %v624 = vpop.f32.mrf.mxu0
        %v625 = vpop.f32.mrf.mxu0
        %v626 = vadd.f32 %v451, %v625
        %v627 = vpop.f32.mrf.mxu0
        %628 = vmatprep.mubr.bf16.mxu0 0
        %629 = vmatmul.mubr.bf16.gmra.mxu0 %v356
        %v630 = vpop.f32.mrf.mxu0
        %v631 = vadd.f32 %v456, %v630
        %v632 = vpop.f32.mrf.mxu0
        %v633 = vpop.f32.mrf.mxu0
        %v634 = vadd.f32 %v459, %v633
        %v635 = vpop.f32.mrf.mxu0
        %636 = vmatprep.mubr.bf16.mxu0 0
        %637 = vmatmul.mubr.bf16.gmra.mxu0 %v359
        %v638 = vpop.f32.mrf.mxu0
        %v639 = vadd.f32 %v464, %v638
        %v640 = vpop.f32.mrf.mxu0
        %v641 = vpop.f32.mrf.mxu0
        %v642 = vadd.f32 %v467, %v641
        %v643 = vpop.f32.mrf.mxu0
        %644 = vmatprep.mubr.bf16.mxu0 0
        %645 = vmatmul.mubr.bf16.gmra.mxu0 %v362
        %v646 = vpop.f32.mrf.mxu0
        %v647 = vadd.f32 %v472, %v646
        %v648 = vpop.f32.mrf.mxu0
        %v649 = vpop.f32.mrf.mxu0
        %v650 = vadd.f32 %v475, %v649
        %v651 = vpop.f32.mrf.mxu0
        %652 = vmatprep.mubr.bf16.mxu0 0
        %653 = vmatmul.mubr.bf16.gmra.mxu0 %v365
        %v654 = vpop.f32.mrf.mxu0
        %v655 = vadd.f32 %v480, %v654
        %v656 = vpop.f32.mrf.mxu0
        %v657 = vpop.f32.mrf.mxu0
        %v658 = vadd.f32 %v483, %v657
        %v659 = vpop.f32.mrf.mxu0
        %660 = vmatprep.mubr.bf16.mxu0 0
        %661 = vmatmul.mubr.bf16.gmra.mxu0 %v368
        %v662 = vpop.f32.mrf.mxu0
        %v663 = vadd.f32 %v488, %v662
        %v664 = vpop.f32.mrf.mxu0
        %v665 = vpop.f32.mrf.mxu0
        %v666 = vadd.f32 %v491, %v665
        %v667 = vpop.f32.mrf.mxu0
        %668 = vmatprep.mubr.bf16.mxu0 0
        %669 = vmatmul.mubr.bf16.gmra.mxu0 %v371
        %v670 = vpop.f32.mrf.mxu0
        %v671 = vadd.f32 %v496, %v670
        %v672 = vpop.f32.mrf.mxu0
        %v673 = vpop.f32.mrf.mxu0
        %v674 = vadd.f32 %v499, %v673
        %v675 = vpop.f32.mrf.mxu0
        %676 = vmatprep.mubr.bf16.mxu0 0
        %677 = vmatmul.mubr.bf16.gmra.mxu0 %v374
        %v678 = vpop.f32.mrf.mxu0
        %v679 = vadd.f32 %v504, %v678
        %v680 = vpop.f32.mrf.mxu0
        %v681 = vpop.f32.mrf.mxu0
        %v682 = vadd.f32 %v507, %v681
        %v683 = vpop.f32.mrf.mxu0
        %684 = vmatprep.mubr.bf16.mxu0 0
        %685 = vmatmul.mubr.bf16.gmra.mxu0 %v377
        %v686 = vpop.f32.mrf.mxu0
        %v687 = vadd.f32 %v512, %v686
        %v688 = vpop.f32.mrf.mxu0
        %v689 = vpop.f32.mrf.mxu0
        %v690 = vadd.f32 %v515, %v689
        %v691 = vpop.f32.mrf.mxu0
        %692 = vmatprep.mubr.bf16.mxu0 0
        %693 = vmatmul.mubr.bf16.gmra.mxu0 %v380
        %v694 = vpop.f32.mrf.mxu0
        %v695 = vadd.f32 %v520, %v694
        %v696 = vpop.f32.mrf.mxu0
        %v697 = vpop.f32.mrf.mxu0
        %v698 = vadd.f32 %v523, %v697
        %v699 = vpop.f32.mrf.mxu0
        %700 = vmatprep.mubr.bf16.mxu0 0
        %701 = vmatmul.mubr.bf16.gmra.mxu0 %v383
        %v702 = vpop.f32.mrf.mxu0
        %v703 = vadd.f32 %v528, %v702
        %v704 = vpop.f32.mrf.mxu0
        %v705 = vpop.f32.mrf.mxu0
        %v706 = vadd.f32 %v531, %v705
        %v707 = vpop.f32.mrf.mxu0
        %708 = vmatprep.mubr.bf16.mxu0 0
        %709 = vmatmul.mubr.bf16.gmra.mxu0 %v386
        %v710 = vpop.f32.mrf.mxu0
        %v711 = vadd.f32 %v536, %v710
        %v712 = vpop.f32.mrf.mxu0
        %v713 = vpop.f32.mrf.mxu0
        %v714 = vadd.f32 %v539, %v713
        %v715 = vpop.f32.mrf.mxu0
        %716 = vmatprep.mubr.bf16.mxu0 0
        %717 = vmatmul.mubr.bf16.gmra.mxu0 %v389
        %v718 = vpop.f32.mrf.mxu0
        %v719 = vadd.f32 %v544, %v718
        %v720 = vpop.f32.mrf.mxu0
        %v721 = vpop.f32.mrf.mxu0
        %v722 = vadd.f32 %v547, %v721
        %v723 = vpop.f32.mrf.mxu0
        %724 = vmatprep.mubr.bf16.mxu0 0
        %725 = vmatmul.mubr.bf16.gmra.mxu0 %v392
        %v726 = vpop.f32.mrf.mxu0
        %v727 = vadd.f32 %v552, %v726
        %v728 = vpop.f32.mrf.mxu0
        %v729 = vpop.f32.mrf.mxu0
        %v730 = vadd.f32 %v555, %v729
        %v731 = vpop.f32.mrf.mxu0
        %732 = vdwg.mxu0
        %v733 = vld [vmem:[%s221 + $0x10] sm:$0xf]
        %v734 = vld [vmem:[%s221 + $0x14] sm:$0xf]
        %v735 = vld [vmem:[%s221 + $0x18] sm:$0xf]
        %v736 = vld [vmem:[%s221 + $0x1c] sm:$0xf]
        %v737 = vld [vmem:[%s221 + $0x20] sm:$0xf]
        %v738 = vld [vmem:[%s221 + $0x24] sm:$0xf]
        %v739 = vld [vmem:[%s221 + $0x28] sm:$0xf]
        %v740 = vld [vmem:[%s221 + $0x2c] sm:$0xf]
        %v741 = vld [vmem:[%s221 + $0x30] sm:$0xf]
        %v742 = vld [vmem:[%s221 + $0x34] sm:$0xf]
        %v743 = vld [vmem:[%s221 + $0x38] sm:$0xf]
        %v744 = vld [vmem:[%s221 + $0x3c] sm:$0xf]
        %v745 = vld [vmem:[%s221 + $0x40] sm:$0xf]
        %v746 = vld [vmem:[%s221 + $0x44] sm:$0xf]
        %v747 = vld [vmem:[%s221 + $0x48] sm:$0xf]
        %v748 = vld [vmem:[%s221 + $0x4c] sm:$0xf]
        %v749 = vld [vmem:[%s221 + $0x50] sm:$0xf]
        %v750 = vld [vmem:[%s221 + $0x54] sm:$0xf]
        %v751 = vld [vmem:[%s221 + $0x58] sm:$0xf]
        %v752 = vld [vmem:[%s221 + $0x5c] sm:$0xf]
        %v753 = vld [vmem:[%s221 + $0x60] sm:$0xf]
        %v754 = vld [vmem:[%s221 + $0x64] sm:$0xf]
        %v755 = vld [vmem:[%s221 + $0x68] sm:$0xf]
        %v756 = vld [vmem:[%s221 + $0x6c] sm:$0xf]
        %v757 = vld [vmem:[%s221 + $0x70] sm:$0xf]
        %v758 = vld [vmem:[%s221 + $0x74] sm:$0xf]
        %v759 = vld [vmem:[%s221 + $0x78] sm:$0xf]
        %v760 = vld [vmem:[%s221 + $0x7c] sm:$0xf]
        %v761 = vld [vmem:[%s221 + $0x80] sm:$0xf]
        %v762 = vld [vmem:[%s221 + $0x84] sm:$0xf]
        %v763 = vld [vmem:[%s221 + $0x88] sm:$0xf]
        %v764 = vld [vmem:[%s221 + $0x8c] sm:$0xf]
        %s765 = scalar_lea.vmem %s1, 16
        %v766 = vld [vmem:[%s765] sm:$0xf]
        %v767 = vld [vmem:[%s765 + $0x4] sm:$0xf]
        %v800 = vunpack.c.l.b16 %v733
        %v801 = vunpack.c.l.b16 %v734
        %v802 = vunpack.c.l.b16 %v735
        %v803 = vunpack.c.l.b16 %v736
        %v804 = vunpack.c.l.b16 %v737
        %v805 = vunpack.c.l.b16 %v738
        %v806 = vunpack.c.l.b16 %v739
        %v807 = vunpack.c.l.b16 %v740
        %v808 = vunpack.c.l.b16 %v741
        %v809 = vunpack.c.l.b16 %v742
        %v810 = vunpack.c.l.b16 %v743
        %v811 = vunpack.c.l.b16 %v744
        %v812 = vunpack.c.l.b16 %v745
        %v813 = vunpack.c.l.b16 %v746
        %v814 = vunpack.c.l.b16 %v747
        %v815 = vunpack.c.l.b16 %v748
        %v816 = vunpack.c.l.b16 %v749
        %v817 = vunpack.c.l.b16 %v750
        %v818 = vunpack.c.l.b16 %v751
        %v819 = vunpack.c.l.b16 %v752
        %v820 = vunpack.c.l.b16 %v753
        %v821 = vunpack.c.l.b16 %v754
        %v822 = vunpack.c.l.b16 %v755
        %v823 = vunpack.c.l.b16 %v756
        %v824 = vunpack.c.l.b16 %v757
        %v825 = vunpack.c.l.b16 %v758
        %v826 = vunpack.c.l.b16 %v759
        %v827 = vunpack.c.l.b16 %v760
        %v828 = vunpack.c.l.b16 %v761
        %v829 = vunpack.c.l.b16 %v762
        %v830 = vunpack.c.l.b16 %v763
        %v831 = vunpack.c.l.b16 %v764
        %v832 = vpack.c.b16 %v801, %v800
        %v833 = vpack.c.b16 %v803, %v802
        %v834 = vpack.c.b16 %v805, %v804
        %v835 = vpack.c.b16 %v807, %v806
        %v836 = vpack.c.b16 %v809, %v808
        %v837 = vpack.c.b16 %v811, %v810
        %v838 = vpack.c.b16 %v813, %v812
        %v839 = vpack.c.b16 %v815, %v814
        %v840 = vpack.c.b16 %v817, %v816
        %v841 = vpack.c.b16 %v819, %v818
        %v842 = vpack.c.b16 %v821, %v820
        %v843 = vpack.c.b16 %v823, %v822
        %v844 = vpack.c.b16 %v825, %v824
        %v845 = vpack.c.b16 %v827, %v826
        %v846 = vpack.c.b16 %v829, %v828
        %v847 = vpack.c.b16 %v831, %v830
        %v850 = vunpack.c.l.b16 %v766
        %v851 = vunpack.c.l.b16 %v767
        %v852 = vpack.c.b16 %v851, %v850
        %v855 = vsel %vm348, %v832, 0
        %v858 = vsel %vm348, %v833, 0
        %v861 = vsel %vm348, %v834, 0
        %v864 = vsel %vm348, %v835, 0
        %v867 = vsel %vm348, %v836, 0
        %v870 = vsel %vm348, %v837, 0
        %v873 = vsel %vm348, %v838, 0
        %v876 = vsel %vm348, %v839, 0
        %v879 = vsel %vm348, %v840, 0
        %v882 = vsel %vm348, %v841, 0
        %v885 = vsel %vm348, %v842, 0
        %v888 = vsel %vm348, %v843, 0
        %v891 = vsel %vm348, %v844, 0
        %v894 = vsel %vm348, %v845, 0
        %v897 = vsel %vm348, %v846, 0
        %v900 = vsel %vm348, %v847, 0
        %902 = vmatprep.subr.bf16.mxu0 0
        %903 = vmatpush1.bf16.msra.mxu0 0
        %904 = vmatprep.subr.bf16.mxu0 0
        %905 = vmatpush1.bf16.msra.mxu0 0
        %906 = vmatprep.subr.bf16.mxu0 0
        %907 = vmatpush1.bf16.msra.mxu0 0
        %908 = vmatprep.subr.bf16.mxu0 0
        %909 = vmatpush1.bf16.msra.mxu0 0
        %910 = vmatprep.subr.bf16.mxu0 0
        %911 = vmatpush1.bf16.msra.mxu0 0
        %912 = vmatprep.subr.bf16.mxu0 0
        %913 = vmatpush1.bf16.msra.mxu0 0
        %914 = vmatprep.subr.bf16.mxu0 0
        %915 = vmatpush1.bf16.msra.mxu0 0
        %916 = vmatprep.subr.bf16.mxu0 0
        %917 = vmatpush1.bf16.msra.mxu0 %v852
        %918 = vmatprep.subr.bf16.mxu0 0
        %919 = vmatpush2.bf16.msra.mxu0 0
        %920 = vmatprep.subr.bf16.mxu0 0
        %921 = vmatpush2.bf16.msra.mxu0 0
        %922 = vmatprep.subr.bf16.mxu0 0
        %923 = vmatpush2.bf16.msra.mxu0 0
        %924 = vmatprep.subr.bf16.mxu0 0
        %925 = vmatpush2.bf16.msra.mxu0 0
        %926 = vmatprep.subr.bf16.mxu0 0
        %927 = vmatpush2.bf16.msra.mxu0 0
        %928 = vmatprep.subr.bf16.mxu0 0
        %929 = vmatpush2.bf16.msra.mxu0 0
        %930 = vmatprep.subr.bf16.mxu0 0
        %931 = vmatpush2.bf16.msra.mxu0 0
        %932 = vmatprep.subr.bf16.mxu0 0
        %933 = vmatpush2.bf16.msra.mxu0 0
        %934 = vmatprep.mubr.bf16.mxu0 0
        %935 = vmatmul.mubr.bf16.gmra.mxu0 %v855
        %v936 = vpop.f32.mrf.mxu0
        %v937 = vadd.f32 0.0, %v936
        %v938 = vpop.f32.mrf.mxu0
        %v939 = vpop.f32.mrf.mxu0
        %v940 = vadd.f32 0.0, %v939
        %v941 = vpop.f32.mrf.mxu0
        %942 = vmatprep.mubr.bf16.mxu0 0
        %943 = vmatmul.mubr.bf16.gmra.mxu0 %v858
        %v944 = vpop.f32.mrf.mxu0
        %v945 = vadd.f32 0.0, %v944
        %v946 = vpop.f32.mrf.mxu0
        %v947 = vpop.f32.mrf.mxu0
        %v948 = vadd.f32 0.0, %v947
        %v949 = vpop.f32.mrf.mxu0
        %950 = vmatprep.mubr.bf16.mxu0 0
        %951 = vmatmul.mubr.bf16.gmra.mxu0 %v861
        %v952 = vpop.f32.mrf.mxu0
        %v953 = vadd.f32 0.0, %v952
        %v954 = vpop.f32.mrf.mxu0
        %v955 = vpop.f32.mrf.mxu0
        %v956 = vadd.f32 0.0, %v955
        %v957 = vpop.f32.mrf.mxu0
        %958 = vmatprep.mubr.bf16.mxu0 0
        %959 = vmatmul.mubr.bf16.gmra.mxu0 %v864
        %v960 = vpop.f32.mrf.mxu0
        %v961 = vadd.f32 0.0, %v960
        %v962 = vpop.f32.mrf.mxu0
        %v963 = vpop.f32.mrf.mxu0
        %v964 = vadd.f32 0.0, %v963
        %v965 = vpop.f32.mrf.mxu0
        %966 = vmatprep.mubr.bf16.mxu0 0
        %967 = vmatmul.mubr.bf16.gmra.mxu0 %v867
        %v968 = vpop.f32.mrf.mxu0
        %v969 = vadd.f32 0.0, %v968
        %v970 = vpop.f32.mrf.mxu0
        %v971 = vpop.f32.mrf.mxu0
        %v972 = vadd.f32 0.0, %v971
        %v973 = vpop.f32.mrf.mxu0
        %974 = vmatprep.mubr.bf16.mxu0 0
        %975 = vmatmul.mubr.bf16.gmra.mxu0 %v870
        %v976 = vpop.f32.mrf.mxu0
        %v977 = vadd.f32 0.0, %v976
        %v978 = vpop.f32.mrf.mxu0
        %v979 = vpop.f32.mrf.mxu0
        %v980 = vadd.f32 0.0, %v979
        %v981 = vpop.f32.mrf.mxu0
        %982 = vmatprep.mubr.bf16.mxu0 0
        %983 = vmatmul.mubr.bf16.gmra.mxu0 %v873
        %v984 = vpop.f32.mrf.mxu0
        %v985 = vadd.f32 0.0, %v984
        %v986 = vpop.f32.mrf.mxu0
        %v987 = vpop.f32.mrf.mxu0
        %v988 = vadd.f32 0.0, %v987
        %v989 = vpop.f32.mrf.mxu0
        %990 = vmatprep.mubr.bf16.mxu0 0
        %991 = vmatmul.mubr.bf16.gmra.mxu0 %v876
        %v992 = vpop.f32.mrf.mxu0
        %v993 = vadd.f32 0.0, %v992
        %v994 = vpop.f32.mrf.mxu0
        %v995 = vpop.f32.mrf.mxu0
        %v996 = vadd.f32 0.0, %v995
        %v997 = vpop.f32.mrf.mxu0
        %998 = vmatprep.mubr.bf16.mxu0 0
        %999 = vmatmul.mubr.bf16.gmra.mxu0 %v879
        %v1000 = vpop.f32.mrf.mxu0
        %v1001 = vadd.f32 0.0, %v1000
        %v1002 = vpop.f32.mrf.mxu0
        %v1003 = vpop.f32.mrf.mxu0
        %v1004 = vadd.f32 0.0, %v1003
        %v1005 = vpop.f32.mrf.mxu0
        %1006 = vmatprep.mubr.bf16.mxu0 0
        %1007 = vmatmul.mubr.bf16.gmra.mxu0 %v882
        %v1008 = vpop.f32.mrf.mxu0
        %v1009 = vadd.f32 0.0, %v1008
        %v1010 = vpop.f32.mrf.mxu0
        %v1011 = vpop.f32.mrf.mxu0
        %v1012 = vadd.f32 0.0, %v1011
        %v1013 = vpop.f32.mrf.mxu0
        %1014 = vmatprep.mubr.bf16.mxu0 0
        %1015 = vmatmul.mubr.bf16.gmra.mxu0 %v885
        %v1016 = vpop.f32.mrf.mxu0
        %v1017 = vadd.f32 0.0, %v1016
        %v1018 = vpop.f32.mrf.mxu0
        %v1019 = vpop.f32.mrf.mxu0
        %v1020 = vadd.f32 0.0, %v1019
        %v1021 = vpop.f32.mrf.mxu0
        %1022 = vmatprep.mubr.bf16.mxu0 0
        %1023 = vmatmul.mubr.bf16.gmra.mxu0 %v888
        %v1024 = vpop.f32.mrf.mxu0
        %v1025 = vadd.f32 0.0, %v1024
        %v1026 = vpop.f32.mrf.mxu0
        %v1027 = vpop.f32.mrf.mxu0
        %v1028 = vadd.f32 0.0, %v1027
        %v1029 = vpop.f32.mrf.mxu0
        %1030 = vmatprep.mubr.bf16.mxu0 0
        %1031 = vmatmul.mubr.bf16.gmra.mxu0 %v891
        %v1032 = vpop.f32.mrf.mxu0
        %v1033 = vadd.f32 0.0, %v1032
        %v1034 = vpop.f32.mrf.mxu0
        %v1035 = vpop.f32.mrf.mxu0
        %v1036 = vadd.f32 0.0, %v1035
        %v1037 = vpop.f32.mrf.mxu0
        %1038 = vmatprep.mubr.bf16.mxu0 0
        %1039 = vmatmul.mubr.bf16.gmra.mxu0 %v894
        %v1040 = vpop.f32.mrf.mxu0
        %v1041 = vadd.f32 0.0, %v1040
        %v1042 = vpop.f32.mrf.mxu0
        %v1043 = vpop.f32.mrf.mxu0
        %v1044 = vadd.f32 0.0, %v1043
        %v1045 = vpop.f32.mrf.mxu0
        %1046 = vmatprep.mubr.bf16.mxu0 0
        %1047 = vmatmul.mubr.bf16.gmra.mxu0 %v897
        %v1048 = vpop.f32.mrf.mxu0
        %v1049 = vadd.f32 0.0, %v1048
        %v1050 = vpop.f32.mrf.mxu0
        %v1051 = vpop.f32.mrf.mxu0
        %v1052 = vadd.f32 0.0, %v1051
        %v1053 = vpop.f32.mrf.mxu0
        %1054 = vmatprep.mubr.bf16.mxu0 0
        %1055 = vmatmul.mubr.bf16.gmra.mxu0 %v900
        %v1056 = vpop.f32.mrf.mxu0
        %v1057 = vadd.f32 0.0, %v1056
        %v1058 = vpop.f32.mrf.mxu0
        %v1059 = vpop.f32.mrf.mxu0
        %v1060 = vadd.f32 0.0, %v1059
        %v1061 = vpop.f32.mrf.mxu0
        %1062 = vdwg.mxu0
        %v1063 = vadd.f32 %v607, %v937
        %v1064 = vadd.f32 %v610, %v940
        %v1065 = vadd.f32 %v615, %v945
        %v1066 = vadd.f32 %v618, %v948
        %v1067 = vadd.f32 %v623, %v953
        %v1068 = vadd.f32 %v626, %v956
        %v1069 = vadd.f32 %v631, %v961
        %v1070 = vadd.f32 %v634, %v964
        %v1071 = vadd.f32 %v639, %v969
        %v1072 = vadd.f32 %v642, %v972
        %v1073 = vadd.f32 %v647, %v977
        %v1074 = vadd.f32 %v650, %v980
        %v1075 = vadd.f32 %v655, %v985
        %v1076 = vadd.f32 %v658, %v988
        %v1077 = vadd.f32 %v663, %v993
        %v1078 = vadd.f32 %v666, %v996
        %v1079 = vadd.f32 %v671, %v1001
        %v1080 = vadd.f32 %v674, %v1004
        %v1081 = vadd.f32 %v679, %v1009
        %v1082 = vadd.f32 %v682, %v1012
        %v1083 = vadd.f32 %v687, %v1017
        %v1084 = vadd.f32 %v690, %v1020
        %v1085 = vadd.f32 %v695, %v1025
        %v1086 = vadd.f32 %v698, %v1028
        %v1087 = vadd.f32 %v703, %v1033
        %v1088 = vadd.f32 %v706, %v1036
        %v1089 = vadd.f32 %v711, %v1041
        %v1090 = vadd.f32 %v714, %v1044
        %v1091 = vadd.f32 %v719, %v1049
        %v1092 = vadd.f32 %v722, %v1052
        %v1093 = vadd.f32 %v727, %v1057
        %v1094 = vadd.f32 %v730, %v1060
        %v1095 = vld [vmem:[%s4] sm:$0x1]
        %v1096 = vlaneseq
        %v1097 = vshrl.u32 %v1096, 7
        %v1098 = vsub.s32 0, %v1097
        %v1099 = vrot.slane %v1095, %v1098
        %v1100 = vmul.f32 %v1063, %v1099
        %v1101 = vmul.f32 %v1064, %v1099
        %v1102 = vmul.f32 %v1065, %v1099
        %v1103 = vmul.f32 %v1066, %v1099
        %v1104 = vmul.f32 %v1067, %v1099
        %v1105 = vmul.f32 %v1068, %v1099
        %v1106 = vmul.f32 %v1069, %v1099
        %v1107 = vmul.f32 %v1070, %v1099
        %v1108 = vmul.f32 %v1071, %v1099
        %v1109 = vmul.f32 %v1072, %v1099
        %v1110 = vmul.f32 %v1073, %v1099
        %v1111 = vmul.f32 %v1074, %v1099
        %v1112 = vmul.f32 %v1075, %v1099
        %v1113 = vmul.f32 %v1076, %v1099
        %v1114 = vmul.f32 %v1077, %v1099
        %v1115 = vmul.f32 %v1078, %v1099
        %v1116 = vmul.f32 %v1079, %v1099
        %v1117 = vmul.f32 %v1080, %v1099
        %v1118 = vmul.f32 %v1081, %v1099
        %v1119 = vmul.f32 %v1082, %v1099
        %v1120 = vmul.f32 %v1083, %v1099
        %v1121 = vmul.f32 %v1084, %v1099
        %v1122 = vmul.f32 %v1085, %v1099
        %v1123 = vmul.f32 %v1086, %v1099
        %v1124 = vmul.f32 %v1087, %v1099
        %v1125 = vmul.f32 %v1088, %v1099
        %v1126 = vmul.f32 %v1089, %v1099
        %v1127 = vmul.f32 %v1090, %v1099
        %v1128 = vmul.f32 %v1091, %v1099
        %v1129 = vmul.f32 %v1092, %v1099
        %v1130 = vmul.f32 %v1093, %v1099
        %v1131 = vmul.f32 %v1094, %v1099
        %v1132 = vld [vmem:[%s4 + $0x1] sm:$0x1]
        %v1133 = vlaneseq
        %v1134 = vshrl.u32 %v1133, 7
        %v1135 = vsub.s32 0, %v1134
        %v1136 = vrot.slane %v1132, %v1135
        %v1137 = vadd.f32 %v1100, %v1136
        %v1138 = vadd.f32 %v1101, %v1136
        %v1139 = vadd.f32 %v1102, %v1136
        %v1140 = vadd.f32 %v1103, %v1136
        %v1141 = vadd.f32 %v1104, %v1136
        %v1142 = vadd.f32 %v1105, %v1136
        %v1143 = vadd.f32 %v1106, %v1136
        %v1144 = vadd.f32 %v1107, %v1136
        %v1145 = vadd.f32 %v1108, %v1136
        %v1146 = vadd.f32 %v1109, %v1136
        %v1147 = vadd.f32 %v1110, %v1136
        %v1148 = vadd.f32 %v1111, %v1136
        %v1149 = vadd.f32 %v1112, %v1136
        %v1150 = vadd.f32 %v1113, %v1136
        %v1151 = vadd.f32 %v1114, %v1136
        %v1152 = vadd.f32 %v1115, %v1136
        %v1153 = vadd.f32 %v1116, %v1136
        %v1154 = vadd.f32 %v1117, %v1136
        %v1155 = vadd.f32 %v1118, %v1136
        %v1156 = vadd.f32 %v1119, %v1136
        %v1157 = vadd.f32 %v1120, %v1136
        %v1158 = vadd.f32 %v1121, %v1136
        %v1159 = vadd.f32 %v1122, %v1136
        %v1160 = vadd.f32 %v1123, %v1136
        %v1161 = vadd.f32 %v1124, %v1136
        %v1162 = vadd.f32 %v1125, %v1136
        %v1163 = vadd.f32 %v1126, %v1136
        %v1164 = vadd.f32 %v1127, %v1136
        %v1165 = vadd.f32 %v1128, %v1136
        %v1166 = vadd.f32 %v1129, %v1136
        %v1167 = vadd.f32 %v1130, %v1136
        %v1168 = vadd.f32 %v1131, %v1136
        %v1169 = vmax.f32 %v1137, 0.0
        %v1170 = vmax.f32 %v1138, 0.0
        %v1171 = vmax.f32 %v1139, 0.0
        %v1172 = vmax.f32 %v1140, 0.0
        %v1173 = vmax.f32 %v1141, 0.0
        %v1174 = vmax.f32 %v1142, 0.0
        %v1175 = vmax.f32 %v1143, 0.0
        %v1176 = vmax.f32 %v1144, 0.0
        %v1177 = vmax.f32 %v1145, 0.0
        %v1178 = vmax.f32 %v1146, 0.0
        %v1179 = vmax.f32 %v1147, 0.0
        %v1180 = vmax.f32 %v1148, 0.0
        %v1181 = vmax.f32 %v1149, 0.0
        %v1182 = vmax.f32 %v1150, 0.0
        %v1183 = vmax.f32 %v1151, 0.0
        %v1184 = vmax.f32 %v1152, 0.0
        %v1185 = vmax.f32 %v1153, 0.0
        %v1186 = vmax.f32 %v1154, 0.0
        %v1187 = vmax.f32 %v1155, 0.0
        %v1188 = vmax.f32 %v1156, 0.0
        %v1189 = vmax.f32 %v1157, 0.0
        %v1190 = vmax.f32 %v1158, 0.0
        %v1191 = vmax.f32 %v1159, 0.0
        %v1192 = vmax.f32 %v1160, 0.0
        %v1193 = vmax.f32 %v1161, 0.0
        %v1194 = vmax.f32 %v1162, 0.0
        %v1195 = vmax.f32 %v1163, 0.0
        %v1196 = vmax.f32 %v1164, 0.0
        %v1197 = vmax.f32 %v1165, 0.0
        %v1198 = vmax.f32 %v1166, 0.0
        %v1199 = vmax.f32 %v1167, 0.0
        %v1200 = vmax.f32 %v1168, 0.0
        %v1201 = vpack.c.bf16 %v1170, %v1169
        %v1202 = vpack.c.bf16 %v1172, %v1171
        %v1203 = vpack.c.bf16 %v1174, %v1173
        %v1204 = vpack.c.bf16 %v1176, %v1175
        %v1205 = vpack.c.bf16 %v1178, %v1177
        %v1206 = vpack.c.bf16 %v1180, %v1179
        %v1207 = vpack.c.bf16 %v1182, %v1181
        %v1208 = vpack.c.bf16 %v1184, %v1183
        %v1209 = vpack.c.bf16 %v1186, %v1185
        %v1210 = vpack.c.bf16 %v1188, %v1187
        %v1211 = vpack.c.bf16 %v1190, %v1189
        %v1212 = vpack.c.bf16 %v1192, %v1191
        %v1213 = vpack.c.bf16 %v1194, %v1193
        %v1214 = vpack.c.bf16 %v1196, %v1195
        %v1215 = vpack.c.bf16 %v1198, %v1197
        %v1216 = vpack.c.bf16 %v1200, %v1199
        %v1217 = vld [vmem:[%s2] sm:$0xf]
        %v1218 = vld [vmem:[%s2 + $0x4] sm:$0xf]
        %v1219 = vld [vmem:[%s2 + $0x8] sm:$0xf]
        %v1220 = vld [vmem:[%s2 + $0xc] sm:$0xf]
        %v1221 = vld [vmem:[%s2 + $0x10] sm:$0xf]
        %v1222 = vld [vmem:[%s2 + $0x14] sm:$0xf]
        %v1223 = vld [vmem:[%s2 + $0x18] sm:$0xf]
        %v1224 = vld [vmem:[%s2 + $0x1c] sm:$0xf]
        %v1225 = vld [vmem:[%s2 + $0x20] sm:$0xf]
        %v1226 = vld [vmem:[%s2 + $0x24] sm:$0xf]
        %v1227 = vld [vmem:[%s2 + $0x28] sm:$0xf]
        %v1228 = vld [vmem:[%s2 + $0x2c] sm:$0xf]
        %v1229 = vld [vmem:[%s2 + $0x30] sm:$0xf]
        %v1230 = vld [vmem:[%s2 + $0x34] sm:$0xf]
        %v1231 = vld [vmem:[%s2 + $0x38] sm:$0xf]
        %v1232 = vld [vmem:[%s2 + $0x3c] sm:$0xf]
        %v1249 = vunpack.c.l.b16 %v1217
        %v1250 = vunpack.c.l.b16 %v1218
        %v1251 = vunpack.c.l.b16 %v1219
        %v1252 = vunpack.c.l.b16 %v1220
        %v1253 = vunpack.c.l.b16 %v1221
        %v1254 = vunpack.c.l.b16 %v1222
        %v1255 = vunpack.c.l.b16 %v1223
        %v1256 = vunpack.c.l.b16 %v1224
        %v1257 = vunpack.c.l.b16 %v1225
        %v1258 = vunpack.c.l.b16 %v1226
        %v1259 = vunpack.c.l.b16 %v1227
        %v1260 = vunpack.c.l.b16 %v1228
        %v1261 = vunpack.c.l.b16 %v1229
        %v1262 = vunpack.c.l.b16 %v1230
        %v1263 = vunpack.c.l.b16 %v1231
        %v1264 = vunpack.c.l.b16 %v1232
        %v1265 = vpack.c.b16 %v1250, %v1249
        %v1266 = vpack.c.b16 %v1252, %v1251
        %v1267 = vpack.c.b16 %v1254, %v1253
        %v1268 = vpack.c.b16 %v1256, %v1255
        %v1269 = vpack.c.b16 %v1258, %v1257
        %v1270 = vpack.c.b16 %v1260, %v1259
        %v1271 = vpack.c.b16 %v1262, %v1261
        %v1272 = vpack.c.b16 %v1264, %v1263
        %1281 = vmatprep.subr.bf16.mxu0 0
        %1282 = vmatpush1.bf16.msra.mxu0 %v1272
        %1283 = vmatprep.subr.bf16.mxu0 0
        %1284 = vmatpush1.bf16.msra.mxu0 %v1271
        %1285 = vmatprep.subr.bf16.mxu0 0
        %1286 = vmatpush1.bf16.msra.mxu0 %v1270
        %1287 = vmatprep.subr.bf16.mxu0 0
        %1288 = vmatpush1.bf16.msra.mxu0 %v1269
        %1289 = vmatprep.subr.bf16.mxu0 0
        %1290 = vmatpush1.bf16.msra.mxu0 %v1268
        %1291 = vmatprep.subr.bf16.mxu0 0
        %1292 = vmatpush1.bf16.msra.mxu0 %v1267
        %1293 = vmatprep.subr.bf16.mxu0 0
        %1294 = vmatpush1.bf16.msra.mxu0 %v1266
        %1295 = vmatprep.subr.bf16.mxu0 0
        %1296 = vmatpush1.bf16.msra.mxu0 %v1265
        %1297 = vmatprep.subr.bf16.mxu0 0
        %1298 = vmatpush2.bf16.msra.mxu0 0
        %1299 = vmatprep.subr.bf16.mxu0 0
        %1300 = vmatpush2.bf16.msra.mxu0 0
        %1301 = vmatprep.subr.bf16.mxu0 0
        %1302 = vmatpush2.bf16.msra.mxu0 0
        %1303 = vmatprep.subr.bf16.mxu0 0
        %1304 = vmatpush2.bf16.msra.mxu0 0
        %1305 = vmatprep.subr.bf16.mxu0 0
        %1306 = vmatpush2.bf16.msra.mxu0 0
        %1307 = vmatprep.subr.bf16.mxu0 0
        %1308 = vmatpush2.bf16.msra.mxu0 0
        %1309 = vmatprep.subr.bf16.mxu0 0
        %1310 = vmatpush2.bf16.msra.mxu0 0
        %1311 = vmatprep.subr.bf16.mxu0 0
        %1312 = vmatpush2.bf16.msra.mxu0 0
        %1313 = vmatprep.mubr.bf16.mxu0 0
        %1314 = vmatmul.mubr.bf16.gmra.mxu0 %v1201
        %v1315 = vpop.f32.mrf.mxu0
        %v1316 = vadd.f32 0.0, %v1315
        %v1317 = vpop.f32.mrf.mxu0
        %v1318 = vpop.f32.mrf.mxu0
        %v1319 = vadd.f32 0.0, %v1318
        %v1320 = vpop.f32.mrf.mxu0
        %1321 = vmatprep.mubr.bf16.mxu0 0
        %1322 = vmatmul.mubr.bf16.gmra.mxu0 %v1202
        %v1323 = vpop.f32.mrf.mxu0
        %v1324 = vadd.f32 0.0, %v1323
        %v1325 = vpop.f32.mrf.mxu0
        %v1326 = vpop.f32.mrf.mxu0
        %v1327 = vadd.f32 0.0, %v1326
        %v1328 = vpop.f32.mrf.mxu0
        %1329 = vmatprep.mubr.bf16.mxu0 0
        %1330 = vmatmul.mubr.bf16.gmra.mxu0 %v1203
        %v1331 = vpop.f32.mrf.mxu0
        %v1332 = vadd.f32 0.0, %v1331
        %v1333 = vpop.f32.mrf.mxu0
        %v1334 = vpop.f32.mrf.mxu0
        %v1335 = vadd.f32 0.0, %v1334
        %v1336 = vpop.f32.mrf.mxu0
        %1337 = vmatprep.mubr.bf16.mxu0 0
        %1338 = vmatmul.mubr.bf16.gmra.mxu0 %v1204
        %v1339 = vpop.f32.mrf.mxu0
        %v1340 = vadd.f32 0.0, %v1339
        %v1341 = vpop.f32.mrf.mxu0
        %v1342 = vpop.f32.mrf.mxu0
        %v1343 = vadd.f32 0.0, %v1342
        %v1344 = vpop.f32.mrf.mxu0
        %1345 = vmatprep.mubr.bf16.mxu0 0
        %1346 = vmatmul.mubr.bf16.gmra.mxu0 %v1205
        %v1347 = vpop.f32.mrf.mxu0
        %v1348 = vadd.f32 0.0, %v1347
        %v1349 = vpop.f32.mrf.mxu0
        %v1350 = vpop.f32.mrf.mxu0
        %v1351 = vadd.f32 0.0, %v1350
        %v1352 = vpop.f32.mrf.mxu0
        %1353 = vmatprep.mubr.bf16.mxu0 0
        %1354 = vmatmul.mubr.bf16.gmra.mxu0 %v1206
        %v1355 = vpop.f32.mrf.mxu0
        %v1356 = vadd.f32 0.0, %v1355
        %v1357 = vpop.f32.mrf.mxu0
        %v1358 = vpop.f32.mrf.mxu0
        %v1359 = vadd.f32 0.0, %v1358
        %v1360 = vpop.f32.mrf.mxu0
        %1361 = vmatprep.mubr.bf16.mxu0 0
        %1362 = vmatmul.mubr.bf16.gmra.mxu0 %v1207
        %v1363 = vpop.f32.mrf.mxu0
        %v1364 = vadd.f32 0.0, %v1363
        %v1365 = vpop.f32.mrf.mxu0
        %v1366 = vpop.f32.mrf.mxu0
        %v1367 = vadd.f32 0.0, %v1366
        %v1368 = vpop.f32.mrf.mxu0
        %1369 = vmatprep.mubr.bf16.mxu0 0
        %1370 = vmatmul.mubr.bf16.gmra.mxu0 %v1208
        %v1371 = vpop.f32.mrf.mxu0
        %v1372 = vadd.f32 0.0, %v1371
        %v1373 = vpop.f32.mrf.mxu0
        %v1374 = vpop.f32.mrf.mxu0
        %v1375 = vadd.f32 0.0, %v1374
        %v1376 = vpop.f32.mrf.mxu0
        %1377 = vmatprep.mubr.bf16.mxu0 0
        %1378 = vmatmul.mubr.bf16.gmra.mxu0 %v1209
        %v1379 = vpop.f32.mrf.mxu0
        %v1380 = vadd.f32 0.0, %v1379
        %v1381 = vpop.f32.mrf.mxu0
        %v1382 = vpop.f32.mrf.mxu0
        %v1383 = vadd.f32 0.0, %v1382
        %v1384 = vpop.f32.mrf.mxu0
        %1385 = vmatprep.mubr.bf16.mxu0 0
        %1386 = vmatmul.mubr.bf16.gmra.mxu0 %v1210
        %v1387 = vpop.f32.mrf.mxu0
        %v1388 = vadd.f32 0.0, %v1387
        %v1389 = vpop.f32.mrf.mxu0
        %v1390 = vpop.f32.mrf.mxu0
        %v1391 = vadd.f32 0.0, %v1390
        %v1392 = vpop.f32.mrf.mxu0
        %1393 = vmatprep.mubr.bf16.mxu0 0
        %1394 = vmatmul.mubr.bf16.gmra.mxu0 %v1211
        %v1395 = vpop.f32.mrf.mxu0
        %v1396 = vadd.f32 0.0, %v1395
        %v1397 = vpop.f32.mrf.mxu0
        %v1398 = vpop.f32.mrf.mxu0
        %v1399 = vadd.f32 0.0, %v1398
        %v1400 = vpop.f32.mrf.mxu0
        %1401 = vmatprep.mubr.bf16.mxu0 0
        %1402 = vmatmul.mubr.bf16.gmra.mxu0 %v1212
        %v1403 = vpop.f32.mrf.mxu0
        %v1404 = vadd.f32 0.0, %v1403
        %v1405 = vpop.f32.mrf.mxu0
        %v1406 = vpop.f32.mrf.mxu0
        %v1407 = vadd.f32 0.0, %v1406
        %v1408 = vpop.f32.mrf.mxu0
        %1409 = vmatprep.mubr.bf16.mxu0 0
        %1410 = vmatmul.mubr.bf16.gmra.mxu0 %v1213
        %v1411 = vpop.f32.mrf.mxu0
        %v1412 = vadd.f32 0.0, %v1411
        %v1413 = vpop.f32.mrf.mxu0
        %v1414 = vpop.f32.mrf.mxu0
        %v1415 = vadd.f32 0.0, %v1414
        %v1416 = vpop.f32.mrf.mxu0
        %1417 = vmatprep.mubr.bf16.mxu0 0
        %1418 = vmatmul.mubr.bf16.gmra.mxu0 %v1214
        %v1419 = vpop.f32.mrf.mxu0
        %v1420 = vadd.f32 0.0, %v1419
        %v1421 = vpop.f32.mrf.mxu0
        %v1422 = vpop.f32.mrf.mxu0
        %v1423 = vadd.f32 0.0, %v1422
        %v1424 = vpop.f32.mrf.mxu0
        %1425 = vmatprep.mubr.bf16.mxu0 0
        %1426 = vmatmul.mubr.bf16.gmra.mxu0 %v1215
        %v1427 = vpop.f32.mrf.mxu0
        %v1428 = vadd.f32 0.0, %v1427
        %v1429 = vpop.f32.mrf.mxu0
        %v1430 = vpop.f32.mrf.mxu0
        %v1431 = vadd.f32 0.0, %v1430
        %v1432 = vpop.f32.mrf.mxu0
        %1433 = vmatprep.mubr.bf16.mxu0 0
        %1434 = vmatmul.mubr.bf16.gmra.mxu0 %v1216
        %v1435 = vpop.f32.mrf.mxu0
        %v1436 = vadd.f32 0.0, %v1435
        %v1437 = vpop.f32.mrf.mxu0
        %v1438 = vpop.f32.mrf.mxu0
        %v1439 = vadd.f32 0.0, %v1438
        %v1440 = vpop.f32.mrf.mxu0
        %1441 = vdwg.mxu0
        %v1442 = vld [vmem:[%s4 + $0x2] sm:$0x1]
        %v1443 = vlaneseq
        %v1444 = vshrl.u32 %v1443, 7
        %v1445 = vsub.s32 0, %v1444
        %v1446 = vrot.slane %v1442, %v1445
        %v1447 = vmul.f32 %v1316, %v1446
        %v1448 = vmul.f32 %v1319, %v1446
        %v1449 = vmul.f32 %v1324, %v1446
        %v1450 = vmul.f32 %v1327, %v1446
        %v1451 = vmul.f32 %v1332, %v1446
        %v1452 = vmul.f32 %v1335, %v1446
        %v1453 = vmul.f32 %v1340, %v1446
        %v1454 = vmul.f32 %v1343, %v1446
        %v1455 = vmul.f32 %v1348, %v1446
        %v1456 = vmul.f32 %v1351, %v1446
        %v1457 = vmul.f32 %v1356, %v1446
        %v1458 = vmul.f32 %v1359, %v1446
        %v1459 = vmul.f32 %v1364, %v1446
        %v1460 = vmul.f32 %v1367, %v1446
        %v1461 = vmul.f32 %v1372, %v1446
        %v1462 = vmul.f32 %v1375, %v1446
        %v1463 = vmul.f32 %v1380, %v1446
        %v1464 = vmul.f32 %v1383, %v1446
        %v1465 = vmul.f32 %v1388, %v1446
        %v1466 = vmul.f32 %v1391, %v1446
        %v1467 = vmul.f32 %v1396, %v1446
        %v1468 = vmul.f32 %v1399, %v1446
        %v1469 = vmul.f32 %v1404, %v1446
        %v1470 = vmul.f32 %v1407, %v1446
        %v1471 = vmul.f32 %v1412, %v1446
        %v1472 = vmul.f32 %v1415, %v1446
        %v1473 = vmul.f32 %v1420, %v1446
        %v1474 = vmul.f32 %v1423, %v1446
        %v1475 = vmul.f32 %v1428, %v1446
        %v1476 = vmul.f32 %v1431, %v1446
        %v1477 = vmul.f32 %v1436, %v1446
        %v1478 = vmul.f32 %v1439, %v1446
        %v1479 = vld [vmem:[%s4 + $0x3] sm:$0x1]
        %v1480 = vlaneseq
        %v1481 = vshrl.u32 %v1480, 7
        %v1482 = vsub.s32 0, %v1481
        %v1483 = vrot.slane %v1479, %v1482
        %v1484 = vadd.f32 %v1447, %v1483
        %v1485 = vadd.f32 %v1448, %v1483
        %v1486 = vadd.f32 %v1449, %v1483
        %v1487 = vadd.f32 %v1450, %v1483
        %v1488 = vadd.f32 %v1451, %v1483
        %v1489 = vadd.f32 %v1452, %v1483
        %v1490 = vadd.f32 %v1453, %v1483
        %v1491 = vadd.f32 %v1454, %v1483
        %v1492 = vadd.f32 %v1455, %v1483
        %v1493 = vadd.f32 %v1456, %v1483
        %v1494 = vadd.f32 %v1457, %v1483
        %v1495 = vadd.f32 %v1458, %v1483
        %v1496 = vadd.f32 %v1459, %v1483
        %v1497 = vadd.f32 %v1460, %v1483
        %v1498 = vadd.f32 %v1461, %v1483
        %v1499 = vadd.f32 %v1462, %v1483
        %v1500 = vadd.f32 %v1463, %v1483
        %v1501 = vadd.f32 %v1464, %v1483
        %v1502 = vadd.f32 %v1465, %v1483
        %v1503 = vadd.f32 %v1466, %v1483
        %v1504 = vadd.f32 %v1467, %v1483
        %v1505 = vadd.f32 %v1468, %v1483
        %v1506 = vadd.f32 %v1469, %v1483
        %v1507 = vadd.f32 %v1470, %v1483
        %v1508 = vadd.f32 %v1471, %v1483
        %v1509 = vadd.f32 %v1472, %v1483
        %v1510 = vadd.f32 %v1473, %v1483
        %v1511 = vadd.f32 %v1474, %v1483
        %v1512 = vadd.f32 %v1475, %v1483
        %v1513 = vadd.f32 %v1476, %v1483
        %v1514 = vadd.f32 %v1477, %v1483
        %v1515 = vadd.f32 %v1478, %v1483
        %v1516 = vld [vmem:[%s3] sm:$0xff]
        %v1517 = vld [vmem:[%s3 + $0x8] sm:$0xff]
        %v1518 = vld [vmem:[%s3 + $0x10] sm:$0xff]
        %v1519 = vld [vmem:[%s3 + $0x18] sm:$0xff]
        %v1520 = vld [vmem:[%s3 + $0x20] sm:$0xff]
        %v1521 = vld [vmem:[%s3 + $0x28] sm:$0xff]
        %v1522 = vld [vmem:[%s3 + $0x30] sm:$0xff]
        %v1523 = vld [vmem:[%s3 + $0x38] sm:$0xff]
        %v1524 = vld [vmem:[%s3 + $0x40] sm:$0xff]
        %v1525 = vld [vmem:[%s3 + $0x48] sm:$0xff]
        %v1526 = vld [vmem:[%s3 + $0x50] sm:$0xff]
        %v1527 = vld [vmem:[%s3 + $0x58] sm:$0xff]
        %v1528 = vld [vmem:[%s3 + $0x60] sm:$0xff]
        %v1529 = vld [vmem:[%s3 + $0x68] sm:$0xff]
        %v1530 = vld [vmem:[%s3 + $0x70] sm:$0xff]
        %v1531 = vld [vmem:[%s3 + $0x78] sm:$0xff]
        %1532 = vmatprep.subr.mxu0 0.0
        %1533 = vmatpush1.msra.mxu0 %v1531
        %1534 = vmatprep.subr.mxu0 0.0
        %1535 = vmatpush1.msra.mxu0 %v1530
        %1536 = vmatprep.subr.mxu0 0.0
        %1537 = vmatpush1.msra.mxu0 %v1529
        %1538 = vmatprep.subr.mxu0 0.0
        %1539 = vmatpush1.msra.mxu0 %v1528
        %1540 = vmatprep.subr.mxu0 0.0
        %1541 = vmatpush1.msra.mxu0 %v1527
        %1542 = vmatprep.subr.mxu0 0.0
        %1543 = vmatpush1.msra.mxu0 %v1526
        %1544 = vmatprep.subr.mxu0 0.0
        %1545 = vmatpush1.msra.mxu0 %v1525
        %1546 = vmatprep.subr.mxu0 0.0
        %1547 = vmatpush1.msra.mxu0 %v1524
        %1548 = vmatprep.subr.mxu0 0.0
        %1549 = vmatpush1.msra.mxu0 %v1523
        %1550 = vmatprep.subr.mxu0 0.0
        %1551 = vmatpush1.msra.mxu0 %v1522
        %1552 = vmatprep.subr.mxu0 0.0
        %1553 = vmatpush1.msra.mxu0 %v1521
        %1554 = vmatprep.subr.mxu0 0.0
        %1555 = vmatpush1.msra.mxu0 %v1520
        %1556 = vmatprep.subr.mxu0 0.0
        %1557 = vmatpush1.msra.mxu0 %v1519
        %1558 = vmatprep.subr.mxu0 0.0
        %1559 = vmatpush1.msra.mxu0 %v1518
        %1560 = vmatprep.subr.mxu0 0.0
        %1561 = vmatpush1.msra.mxu0 %v1517
        %1562 = vmatprep.subr.mxu0 0.0
        %1563 = vmatpush1.msra.mxu0 %v1516
        %1564 = vmatprep.subr.mxu0 0.0
        %1565 = vmatpush2.msra.mxu0 0.0
        %1566 = vmatprep.subr.mxu0 0.0
        %1567 = vmatpush2.msra.mxu0 0.0
        %1568 = vmatprep.subr.mxu0 0.0
        %1569 = vmatpush2.msra.mxu0 0.0
        %1570 = vmatprep.subr.mxu0 0.0
        %1571 = vmatpush2.msra.mxu0 0.0
        %1572 = vmatprep.subr.mxu0 0.0
        %1573 = vmatpush2.msra.mxu0 0.0
        %1574 = vmatprep.subr.mxu0 0.0
        %1575 = vmatpush2.msra.mxu0 0.0
        %1576 = vmatprep.subr.mxu0 0.0
        %1577 = vmatpush2.msra.mxu0 0.0
        %1578 = vmatprep.subr.mxu0 0.0
        %1579 = vmatpush2.msra.mxu0 0.0
        %1580 = vmatprep.subr.mxu0 0.0
        %1581 = vmatpush2.msra.mxu0 0.0
        %1582 = vmatprep.subr.mxu0 0.0
        %1583 = vmatpush2.msra.mxu0 0.0
        %1584 = vmatprep.subr.mxu0 0.0
        %1585 = vmatpush2.msra.mxu0 0.0
        %1586 = vmatprep.subr.mxu0 0.0
        %1587 = vmatpush2.msra.mxu0 0.0
        %1588 = vmatprep.subr.mxu0 0.0
        %1589 = vmatpush2.msra.mxu0 0.0
        %1590 = vmatprep.subr.mxu0 0.0
        %1591 = vmatpush2.msra.mxu0 0.0
        %1592 = vmatprep.subr.mxu0 0.0
        %1593 = vmatpush2.msra.mxu0 0.0
        %1594 = vmatprep.subr.mxu0 0.0
        %1595 = vmatpush2.msra.mxu0 0.0
        %1596 = vmatprep.mubr.f32.mxu0 0.0
        %1597 = vmatmul.mubr.f32.gmra.mxu0 %v1484
        %v1598 = vpop.f32.mrf.mxu0
        %v1599 = vadd.f32 0.0, %v1598
        %v1600 = vpop.f32.mrf.mxu0
        %1601 = vmatprep.mubr.f32.mxu0 0.0
        %1602 = vmatmul.mubr.f32.gmra.mxu0 %v1485
        %v1603 = vpop.f32.mrf.mxu0
        %v1604 = vadd.f32 0.0, %v1603
        %v1605 = vpop.f32.mrf.mxu0
        %1606 = vmatprep.mubr.f32.mxu0 0.0
        %1607 = vmatmul.mubr.f32.gmra.mxu0 %v1486
        %v1608 = vpop.f32.mrf.mxu0
        %v1609 = vadd.f32 0.0, %v1608
        %v1610 = vpop.f32.mrf.mxu0
        %1611 = vmatprep.mubr.f32.mxu0 0.0
        %1612 = vmatmul.mubr.f32.gmra.mxu0 %v1487
        %v1613 = vpop.f32.mrf.mxu0
        %v1614 = vadd.f32 0.0, %v1613
        %v1615 = vpop.f32.mrf.mxu0
        %1616 = vmatprep.mubr.f32.mxu0 0.0
        %1617 = vmatmul.mubr.f32.gmra.mxu0 %v1488
        %v1618 = vpop.f32.mrf.mxu0
        %v1619 = vadd.f32 0.0, %v1618
        %v1620 = vpop.f32.mrf.mxu0
        %1621 = vmatprep.mubr.f32.mxu0 0.0
        %1622 = vmatmul.mubr.f32.gmra.mxu0 %v1489
        %v1623 = vpop.f32.mrf.mxu0
        %v1624 = vadd.f32 0.0, %v1623
        %v1625 = vpop.f32.mrf.mxu0
        %1626 = vmatprep.mubr.f32.mxu0 0.0
        %1627 = vmatmul.mubr.f32.gmra.mxu0 %v1490
        %v1628 = vpop.f32.mrf.mxu0
        %v1629 = vadd.f32 0.0, %v1628
        %v1630 = vpop.f32.mrf.mxu0
        %1631 = vmatprep.mubr.f32.mxu0 0.0
        %1632 = vmatmul.mubr.f32.gmra.mxu0 %v1491
        %v1633 = vpop.f32.mrf.mxu0
        %v1634 = vadd.f32 0.0, %v1633
        %v1635 = vpop.f32.mrf.mxu0
        %1636 = vmatprep.mubr.f32.mxu0 0.0
        %1637 = vmatmul.mubr.f32.gmra.mxu0 %v1492
        %v1638 = vpop.f32.mrf.mxu0
        %v1639 = vadd.f32 0.0, %v1638
        %v1640 = vpop.f32.mrf.mxu0
        %1641 = vmatprep.mubr.f32.mxu0 0.0
        %1642 = vmatmul.mubr.f32.gmra.mxu0 %v1493
        %v1643 = vpop.f32.mrf.mxu0
        %v1644 = vadd.f32 0.0, %v1643
        %v1645 = vpop.f32.mrf.mxu0
        %1646 = vmatprep.mubr.f32.mxu0 0.0
        %1647 = vmatmul.mubr.f32.gmra.mxu0 %v1494
        %v1648 = vpop.f32.mrf.mxu0
        %v1649 = vadd.f32 0.0, %v1648
        %v1650 = vpop.f32.mrf.mxu0
        %1651 = vmatprep.mubr.f32.mxu0 0.0
        %1652 = vmatmul.mubr.f32.gmra.mxu0 %v1495
        %v1653 = vpop.f32.mrf.mxu0
        %v1654 = vadd.f32 0.0, %v1653
        %v1655 = vpop.f32.mrf.mxu0
        %1656 = vmatprep.mubr.f32.mxu0 0.0
        %1657 = vmatmul.mubr.f32.gmra.mxu0 %v1496
        %v1658 = vpop.f32.mrf.mxu0
        %v1659 = vadd.f32 0.0, %v1658
        %v1660 = vpop.f32.mrf.mxu0
        %1661 = vmatprep.mubr.f32.mxu0 0.0
        %1662 = vmatmul.mubr.f32.gmra.mxu0 %v1497
        %v1663 = vpop.f32.mrf.mxu0
        %v1664 = vadd.f32 0.0, %v1663
        %v1665 = vpop.f32.mrf.mxu0
        %1666 = vmatprep.mubr.f32.mxu0 0.0
        %1667 = vmatmul.mubr.f32.gmra.mxu0 %v1498
        %v1668 = vpop.f32.mrf.mxu0
        %v1669 = vadd.f32 0.0, %v1668
        %v1670 = vpop.f32.mrf.mxu0
        %1671 = vmatprep.mubr.f32.mxu0 0.0
        %1672 = vmatmul.mubr.f32.gmra.mxu0 %v1499
        %v1673 = vpop.f32.mrf.mxu0
        %v1674 = vadd.f32 0.0, %v1673
        %v1675 = vpop.f32.mrf.mxu0
        %1676 = vmatprep.mubr.f32.mxu0 0.0
        %1677 = vmatmul.mubr.f32.gmra.mxu0 %v1500
        %v1678 = vpop.f32.mrf.mxu0
        %v1679 = vadd.f32 0.0, %v1678
        %v1680 = vpop.f32.mrf.mxu0
        %1681 = vmatprep.mubr.f32.mxu0 0.0
        %1682 = vmatmul.mubr.f32.gmra.mxu0 %v1501
        %v1683 = vpop.f32.mrf.mxu0
        %v1684 = vadd.f32 0.0, %v1683
        %v1685 = vpop.f32.mrf.mxu0
        %1686 = vmatprep.mubr.f32.mxu0 0.0
        %1687 = vmatmul.mubr.f32.gmra.mxu0 %v1502
        %v1688 = vpop.f32.mrf.mxu0
        %v1689 = vadd.f32 0.0, %v1688
        %v1690 = vpop.f32.mrf.mxu0
        %1691 = vmatprep.mubr.f32.mxu0 0.0
        %1692 = vmatmul.mubr.f32.gmra.mxu0 %v1503
        %v1693 = vpop.f32.mrf.mxu0
        %v1694 = vadd.f32 0.0, %v1693
        %v1695 = vpop.f32.mrf.mxu0
        %1696 = vmatprep.mubr.f32.mxu0 0.0
        %1697 = vmatmul.mubr.f32.gmra.mxu0 %v1504
        %v1698 = vpop.f32.mrf.mxu0
        %v1699 = vadd.f32 0.0, %v1698
        %v1700 = vpop.f32.mrf.mxu0
        %1701 = vmatprep.mubr.f32.mxu0 0.0
        %1702 = vmatmul.mubr.f32.gmra.mxu0 %v1505
        %v1703 = vpop.f32.mrf.mxu0
        %v1704 = vadd.f32 0.0, %v1703
        %v1705 = vpop.f32.mrf.mxu0
        %1706 = vmatprep.mubr.f32.mxu0 0.0
        %1707 = vmatmul.mubr.f32.gmra.mxu0 %v1506
        %v1708 = vpop.f32.mrf.mxu0
        %v1709 = vadd.f32 0.0, %v1708
        %v1710 = vpop.f32.mrf.mxu0
        %1711 = vmatprep.mubr.f32.mxu0 0.0
        %1712 = vmatmul.mubr.f32.gmra.mxu0 %v1507
        %v1713 = vpop.f32.mrf.mxu0
        %v1714 = vadd.f32 0.0, %v1713
        %v1715 = vpop.f32.mrf.mxu0
        %1716 = vmatprep.mubr.f32.mxu0 0.0
        %1717 = vmatmul.mubr.f32.gmra.mxu0 %v1508
        %v1718 = vpop.f32.mrf.mxu0
        %v1719 = vadd.f32 0.0, %v1718
        %v1720 = vpop.f32.mrf.mxu0
        %1721 = vmatprep.mubr.f32.mxu0 0.0
        %1722 = vmatmul.mubr.f32.gmra.mxu0 %v1509
        %v1723 = vpop.f32.mrf.mxu0
        %v1724 = vadd.f32 0.0, %v1723
        %v1725 = vpop.f32.mrf.mxu0
        %1726 = vmatprep.mubr.f32.mxu0 0.0
        %1727 = vmatmul.mubr.f32.gmra.mxu0 %v1510
        %v1728 = vpop.f32.mrf.mxu0
        %v1729 = vadd.f32 0.0, %v1728
        %v1730 = vpop.f32.mrf.mxu0
        %1731 = vmatprep.mubr.f32.mxu0 0.0
        %1732 = vmatmul.mubr.f32.gmra.mxu0 %v1511
        %v1733 = vpop.f32.mrf.mxu0
        %v1734 = vadd.f32 0.0, %v1733
        %v1735 = vpop.f32.mrf.mxu0
        %1736 = vmatprep.mubr.f32.mxu0 0.0
        %1737 = vmatmul.mubr.f32.gmra.mxu0 %v1512
        %v1738 = vpop.f32.mrf.mxu0
        %v1739 = vadd.f32 0.0, %v1738
        %v1740 = vpop.f32.mrf.mxu0
        %1741 = vmatprep.mubr.f32.mxu0 0.0
        %1742 = vmatmul.mubr.f32.gmra.mxu0 %v1513
        %v1743 = vpop.f32.mrf.mxu0
        %v1744 = vadd.f32 0.0, %v1743
        %v1745 = vpop.f32.mrf.mxu0
        %1746 = vmatprep.mubr.f32.mxu0 0.0
        %1747 = vmatmul.mubr.f32.gmra.mxu0 %v1514
        %v1748 = vpop.f32.mrf.mxu0
        %v1749 = vadd.f32 0.0, %v1748
        %v1750 = vpop.f32.mrf.mxu0
        %1751 = vmatprep.mubr.f32.mxu0 0.0
        %1752 = vmatmul.mubr.f32.gmra.mxu0 %v1515
        %v1753 = vpop.f32.mrf.mxu0
        %v1754 = vadd.f32 0.0, %v1753
        %v1755 = vpop.f32.mrf.mxu0
        %1756 = vdwg.mxu0
        %v1757 = vadd.f32 %v1599, %v1604
        %v1758 = vadd.f32 %v1757, %v1609
        %v1759 = vadd.f32 %v1758, %v1614
        %v1760 = vadd.f32 %v1759, %v1619
        %v1761 = vadd.f32 %v1760, %v1624
        %v1762 = vadd.f32 %v1761, %v1629
        %v1763 = vadd.f32 %v1762, %v1634
        %v1764 = vadd.f32 %v1763, %v1639
        %v1765 = vadd.f32 %v1764, %v1644
        %v1766 = vadd.f32 %v1765, %v1649
        %v1767 = vadd.f32 %v1766, %v1654
        %v1768 = vadd.f32 %v1767, %v1659
        %v1769 = vadd.f32 %v1768, %v1664
        %v1770 = vadd.f32 %v1769, %v1669
        %v1771 = vadd.f32 %v1770, %v1674
        %v1772 = vadd.f32 %v1771, %v1679
        %v1773 = vadd.f32 %v1772, %v1684
        %v1774 = vadd.f32 %v1773, %v1689
        %v1775 = vadd.f32 %v1774, %v1694
        %v1776 = vadd.f32 %v1775, %v1699
        %v1777 = vadd.f32 %v1776, %v1704
        %v1778 = vadd.f32 %v1777, %v1709
        %v1779 = vadd.f32 %v1778, %v1714
        %v1780 = vadd.f32 %v1779, %v1719
        %v1781 = vadd.f32 %v1780, %v1724
        %v1782 = vadd.f32 %v1781, %v1729
        %v1783 = vadd.f32 %v1782, %v1734
        %v1784 = vadd.f32 %v1783, %v1739
        %v1785 = vadd.f32 %v1784, %v1744
        %v1786 = vadd.f32 %v1785, %v1749
        %v1787 = vadd.f32 %v1786, %v1754
        %v1788 = vrot.slane %v1787, 4
        %v1789 = vadd.f32 %v1787, %v1788
        %v1790 = vrot.slane %v1789, 2
        %v1791 = vadd.f32 %v1789, %v1790
        %v1792 = vrot.slane %v1791, 1
        %v1793 = vadd.f32 %v1791, %v1792
        %v1794 = vmul.f32 %v1793, 0.00390625
        %v1795 = vld [vmem:[%s4 + $0x4] sm:$0x1]
        %v1796 = vadd.f32 %v1794, %v1795
        %1797 = vst [vmem:[%s216] sm:$0x1] %v1796
        %s1798 = sand.u32 %s137, 1
        %s1799 = scalar_lea.sflag [#allocation3], %s1798
        %s1800 = sand.u32 %s137, 1
        %s1801 = scalar_lea.vmem [#allocation2], %s1800
        // Predicated region
        $region41: #{master_network_forward.1} parent=39 // pred_check
          %p1802 = pneg %p147
        $region42: #{master_network_forward.1} parent=39 // pred_check_branch
          %1804 = sbr.rel (%p1802) target = $region44
        $region43: #{master_network_forward.1} parent=39 // pred_region
          %s1806 = ssub.s32 16, 16
          %1807 = vsyncadd %s1799, %s1806
          %s1808 = smul.addr %s19, 16
          %s1809 = scalar_lea.hbm %s5, %s1808
          %s1811 = sshll.u32 %s1801, 4
          %s1812 = int_to_ptr.vmem [resolvable:$true] %s1811
          %1814 = dma.vmem_to_hbm [thread:$0]  %s1812, 16, %s1809, %s1799
        $region44: #{master_network_forward.1} parent=39 // pred_fallthru
          _
      $region40: #{master_network_forward.1} parent=5 // pred_fallthru
        _
      %p1815 = scmp.le.s32.totalorder 2, %s14
      // Predicated region
      $region45: #{master_network_forward.1} parent=5 // pred_check
        %p1816 = pneg %p1815
      $region46: #{master_network_forward.1} parent=5 // pred_check_branch
        %1818 = sbr.rel (%p1816) target = $region48
      $region47: #{master_network_forward.1} parent=5 // pred_region
        %s1819 = ssub.s32 %s14, 2
        // Predicated region
        $region49: #{master_network_forward.1} parent=47 // pred_check
          %p1820 = pneg %p153
        $region50: #{master_network_forward.1} parent=47 // pred_check_branch
          %1822 = sbr.rel (%p1820) target = $region52
        $region51: #{master_network_forward.1} parent=47 // pred_region
          %s1823 = sand.u32 %s138, 1
          %s1824 = scalar_lea.sflag [#allocation3], %s1823
          %s1825 = sand.u32 %s138, 1
          %s1826 = scalar_lea.vmem [#allocation2], %s1825
          %1827 = dma.done %s1824, 16
        $region52: #{master_network_forward.1} parent=47 // pred_fallthru
          _
      $region48: #{master_network_forward.1} parent=5 // pred_fallthru
        _
    $region6: #{master_network_forward.1} parent=1 // loop_footer
      %s18 = sadd.s32 1, %s14
    $region7: #{master_network_forward.1} parent=1 // loop_footer_branch
      %13 = sbr.rel target = $region3
    $region8: #{master_network_forward.1} parent=1 // loop_exit
      _
    %1828 = vsyncpa [#allocation3], 1
    %s1829 = scalar_lea.sflag [#allocation3], 1
    %1830 = vsyncpa %s1829, 1

</llo_original>
